<compile_context>
chip_gen: v7x
topology: tpu7x:2x2x1
jax: 0.10.0
libtpu: 0.0.40
codegen_flags: <defaults>
</compile_context>

<pallas_src>
import jax
import jax.numpy as jnp
from jax.experimental import pallas as pl

# ----------------------------- model config -----------------------------
VOCAB_SIZE = 100
TYPE_VOCAB = 2
MAX_POS = 16
HIDDEN = 32
NUM_HEADS = 2
HEAD_DIM = HIDDEN // NUM_HEADS
INTERMEDIATE = 64
NUM_LAYERS = 2
LN_EPS = 1e-12


# ----------------------------- fused Pallas kernel -----------------------------
def _bert_kernel(ids_ref, pos_ref, mask_ref,
                 wemb_ref, pemb_ref, temb_ref,
                 emb_g_ref, emb_b_ref,
                 wqkv_ref, bqkv_ref,
                 wo_ref, bo_ref, ln1g_ref, ln1b_ref,
                 wi_ref, bi_ref, wo2_ref, bo2_ref, ln2g_ref, ln2b_ref,
                 poolw_ref, poolb_ref, clsw_ref, clsb_ref,
                 out_ref):
    """Whole BERT encoder + pooler + classifier in one kernel invocation.

    ids_ref:  (B*S, 1) int32 token ids
    pos_ref:  (B*S, 1) int32 position ids
    mask_ref: (B, 1, S) int32 attention mask (1 = keep, 0 = pad)
    out_ref:  (B, 1)    sigmoid probabilities
    """
    B = mask_ref.shape[0]
    S = mask_ref.shape[2]
    BS = ids_ref.shape[0]
    H = wemb_ref.shape[-1]
    V = wemb_ref.shape[0]
    P = pemb_ref.shape[0]
    L = wqkv_ref.shape[0]

    def mm(a, b):
        # bf16 MXU inputs, f32 accumulation.
        return jnp.dot(a.astype(jnp.bfloat16), b.astype(jnp.bfloat16),
                       preferred_element_type=jnp.float32)

    def layernorm(h, g, b):
        # var = E[x^2] - mu^2: the two lane reductions are data-independent.
        mu = jnp.mean(h, axis=-1, keepdims=True)
        ms = jnp.mean(h * h, axis=-1, keepdims=True)
        var = ms - mu * mu
        return (h - mu) * jax.lax.rsqrt(var + LN_EPS) * g + b

    # ---- embeddings: exact one-hot gathers on the MXU (kept in f32) ------
    vidx = jax.lax.broadcasted_iota(jnp.int32, (BS, V), 1)
    onehot_w = (ids_ref[...] == vidx).astype(jnp.float32)            # (BS, V)
    pidx = jax.lax.broadcasted_iota(jnp.int32, (BS, P), 1)
    onehot_p = (pos_ref[...] == pidx).astype(jnp.float32)            # (BS, P)
    emb = (jnp.dot(onehot_w, wemb_ref[...], preferred_element_type=jnp.float32)
           + jnp.dot(onehot_p, pemb_ref[...], preferred_element_type=jnp.float32)
           + temb_ref[0:1, :])          # token_type_ids default to 0 in the ref
    x = layernorm(emb, emb_g_ref[...], emb_b_ref[...])               # (BS, H)

    # Additive attention-mask bias, (B, 1, S).
    mbias = (1.0 - mask_ref[...].astype(jnp.float32)) * (-1e9)

    for l in range(L):
        # --- self-attention: fused QKV projection (scale folded into Q) ---
        qkv = mm(x, wqkv_ref[l]) + bqkv_ref[l]                        # (BS, 3H)

        ctx_heads = []
        for h in range(NUM_HEADS):
            qh = qkv[:, h * HEAD_DIM:(h + 1) * HEAD_DIM].reshape(B, S, HEAD_DIM)
            kh = qkv[:, H + h * HEAD_DIM:H + (h + 1) * HEAD_DIM].reshape(B, S, HEAD_DIM)
            vh = qkv[:, 2 * H + h * HEAD_DIM:2 * H + (h + 1) * HEAD_DIM].reshape(B, S, HEAD_DIM)

            s = jnp.einsum('bqd,bkd->bqk',
                           qh.astype(jnp.bfloat16), kh.astype(jnp.bfloat16),
                           preferred_element_type=jnp.float32)        # (B, S, S)
            s = s + mbias
            m = jnp.max(s, axis=-1, keepdims=True)
            p = jnp.exp(s - m)
            denom = jnp.sum(p, axis=-1, keepdims=True)
            p = p * pl.reciprocal(denom, approx=True)                 # EUP divide
            ctx = jnp.einsum('bqk,bkd->bqd',
                             p.astype(jnp.bfloat16), vh.astype(jnp.bfloat16),
                             preferred_element_type=jnp.float32)      # (B, S, Dh)
            ctx_heads.append(ctx.reshape(BS, HEAD_DIM))

        # One wide output projection instead of NUM_HEADS narrow ones.
        ctx_all = jnp.concatenate(ctx_heads, axis=-1)                 # (BS, H)
        attn_out = mm(ctx_all, wo_ref[l]) + bo_ref[l]
        x = layernorm(attn_out + x, ln1g_ref[l], ln1b_ref[l])

        # --- feed-forward --------------------------------------------------
        inter = mm(x, wi_ref[l]) + bi_ref[l]                          # (BS, I)
        # TODO(synk): HF BERT uses exact erf-GELU; tanh-approx used here for
        # robust Mosaic lowering.
        inter = jax.nn.gelu(inter, approximate=True)
        ffn = mm(inter, wo2_ref[l]) + bo2_ref[l]                      # (BS, H)
        x = layernorm(ffn + x, ln2g_ref[l], ln2b_ref[l])

    # --- pooler (tanh on [CLS]) + classifier (sigmoid) ---------------------
    cls = x.reshape(B, S, H)[:, 0, :]                                 # (B, H)
    pooled = jnp.tanh(mm(cls, poolw_ref[...]) + poolb_ref[...])
    logits = mm(pooled, clsw_ref[...]) + clsb_ref[...]                # (B, 1)
    out_ref[...] = jax.nn.sigmoid(logits)


# ----------------------------- parameters -----------------------------
def init_params(key):
    def normal(k, shape, std=0.02):
        return jax.random.normal(k, shape, jnp.float32) * std

    keys = iter(jax.random.split(key, 8 + NUM_LAYERS * 8))
    p = {
        "word_emb": normal(next(keys), (VOCAB_SIZE, HIDDEN)),
        "pos_emb": normal(next(keys), (MAX_POS, HIDDEN)),
        "type_emb": normal(next(keys), (TYPE_VOCAB, HIDDEN)),
        "emb_ln_g": jnp.ones((1, HIDDEN), jnp.float32),
        "emb_ln_b": jnp.zeros((1, HIDDEN), jnp.float32),
        "pooler_w": normal(next(keys), (HIDDEN, HIDDEN)),
        "pooler_b": jnp.zeros((1, HIDDEN), jnp.float32),
        "cls_w": normal(next(keys), (HIDDEN, 1)),
        "cls_b": jnp.zeros((1, 1), jnp.float32),
    }
    scale = 1.0 / (HEAD_DIM ** 0.5)
    wqkv, wo, wi, wo2 = [], [], [], []
    for _ in range(NUM_LAYERS):
        w = normal(next(keys), (HIDDEN, 3 * HIDDEN))                  # fused Q|K|V
        # Fold the attention 1/sqrt(Dh) scale into the Q columns (host-side,
        # once).  The Q bias columns would need the same scaling if nonzero.
        w = w.at[:, :HIDDEN].multiply(scale)
        wqkv.append(w)
        wo.append(normal(next(keys), (HIDDEN, HIDDEN)))
        wi.append(normal(next(keys), (HIDDEN, INTERMEDIATE)))
        wo2.append(normal(next(keys), (INTERMEDIATE, HIDDEN)))
    p.update({
        "wqkv": jnp.stack(wqkv),
        "bqkv": jnp.zeros((NUM_LAYERS, 1, 3 * HIDDEN), jnp.float32),
        "attn_wo": jnp.stack(wo),
        "attn_bo": jnp.zeros((NUM_LAYERS, 1, HIDDEN), jnp.float32),
        "ln1_g": jnp.ones((NUM_LAYERS, 1, HIDDEN), jnp.float32),
        "ln1_b": jnp.zeros((NUM_LAYERS, 1, HIDDEN), jnp.float32),
        "ffn_wi": jnp.stack(wi),
        "ffn_bi": jnp.zeros((NUM_LAYERS, 1, INTERMEDIATE), jnp.float32),
        "ffn_wo": jnp.stack(wo2),
        "ffn_bo": jnp.zeros((NUM_LAYERS, 1, HIDDEN), jnp.float32),
        "ln2_g": jnp.ones((NUM_LAYERS, 1, HIDDEN), jnp.float32),
        "ln2_b": jnp.zeros((NUM_LAYERS, 1, HIDDEN), jnp.float32),
    })
    return p


# ----------------------------- forward pass -----------------------------
def vanilla_bert_forward(params, input_ids, attention_mask, type_ids, position_ids):
    # NB: the reference PyTorch forward never passes type_ids to self.bert,
    # so token-type embedding row 0 is used for every position.
    del type_ids
    B, S = input_ids.shape

    # Only trivial int32 reshapes stay outside the kernel; the embedding
    # gathers and mask-bias math run inside it.
    ids2 = input_ids.reshape(B * S, 1).astype(jnp.int32)
    pos2 = position_ids.reshape(B * S, 1).astype(jnp.int32)
    mask3 = attention_mask.reshape(B, 1, S).astype(jnp.int32)

    operands = (
        ids2, pos2, mask3,
        params["word_emb"], params["pos_emb"], params["type_emb"],
        params["emb_ln_g"], params["emb_ln_b"],
        params["wqkv"], params["bqkv"],
        params["attn_wo"], params["attn_bo"],
        params["ln1_g"], params["ln1_b"],
        params["ffn_wi"], params["ffn_bi"],
        params["ffn_wo"], params["ffn_bo"],
        params["ln2_g"], params["ln2_b"],
        params["pooler_w"], params["pooler_b"],
        params["cls_w"], params["cls_b"],
    )

    # Grid-less single-shot call: every operand is whole-array resident in
    # VMEM (total footprint << 1 MiB on all generations), no pipelining.
    out = pl.pallas_call(
        _bert_kernel,
        out_shape=jax.ShapeDtypeStruct((B, 1), jnp.float32),
    )(*operands)

    # self.liner + torch.sigmoid + squeeze(-1); nn.Dropout is unused in forward.
    return out[:, 0]                                                  # (B,)


# ----------------------------- main -----------------------------
if __name__ == "__main__":
    key = jax.random.PRNGKey(0)
    pkey, ikey = jax.random.split(key)

    params = init_params(pkey)

    B, S = 2, 8
    input_ids = jax.random.randint(ikey, (B, S), 0, VOCAB_SIZE, dtype=jnp.int32)
    attention_mask = jnp.array(
        [[1, 1, 1, 1, 1, 1, 1, 1],
         [1, 1, 1, 1, 1, 1, 0, 0]], dtype=jnp.int32)
    type_ids = jnp.zeros((B, S), dtype=jnp.int32).at[:, S // 2:].set(1)
    position_ids = jnp.broadcast_to(jnp.arange(S, dtype=jnp.int32), (B, S))

    fwd = jax.jit(vanilla_bert_forward)
    out = fwd(params, input_ids, attention_mask, type_ids, position_ids)
    out = jax.block_until_ready(out)

    assert out.shape == (B,)
    assert bool(jnp.all(jnp.isfinite(out)))
    assert bool(jnp.all((out >= 0.0) & (out <= 1.0)))
    print("KERNEL_OK")
</pallas_src>

<mosaic_0001>
module attributes {stable_mosaic.version = 11 : i64} {
  func.func @_bert_kernel(%arg0: memref<16x1xi32, #tpu.memory_space<vmem>>, %arg1: memref<16x1xi32, #tpu.memory_space<vmem>>, %arg2: memref<2x1x8xi32, #tpu.memory_space<vmem>>, %arg3: memref<100x32xf32, #tpu.memory_space<vmem>>, %arg4: memref<16x32xf32, #tpu.memory_space<vmem>>, %arg5: memref<2x32xf32, #tpu.memory_space<vmem>>, %arg6: memref<1x32xf32, #tpu.memory_space<vmem>>, %arg7: memref<1x32xf32, #tpu.memory_space<vmem>>, %arg8: memref<2x32x96xf32, #tpu.memory_space<vmem>>, %arg9: memref<2x1x96xf32, #tpu.memory_space<vmem>>, %arg10: memref<2x32x32xf32, #tpu.memory_space<vmem>>, %arg11: memref<2x1x32xf32, #tpu.memory_space<vmem>>, %arg12: memref<2x1x32xf32, #tpu.memory_space<vmem>>, %arg13: memref<2x1x32xf32, #tpu.memory_space<vmem>>, %arg14: memref<2x32x64xf32, #tpu.memory_space<vmem>>, %arg15: memref<2x1x64xf32, #tpu.memory_space<vmem>>, %arg16: memref<2x64x32xf32, #tpu.memory_space<vmem>>, %arg17: memref<2x1x32xf32, #tpu.memory_space<vmem>>, %arg18: memref<2x1x32xf32, #tpu.memory_space<vmem>>, %arg19: memref<2x1x32xf32, #tpu.memory_space<vmem>>, %arg20: memref<32x32xf32, #tpu.memory_space<vmem>>, %arg21: memref<1x32xf32, #tpu.memory_space<vmem>>, %arg22: memref<32x1xf32, #tpu.memory_space<vmem>>, %arg23: memref<1x1xf32, #tpu.memory_space<vmem>>, %arg24: memref<2x1xf32, #tpu.memory_space<vmem>>) attributes {dimension_semantics = [], scalar_prefetch = 0 : i64, scratch_operands = 0 : i64, tpu.core_type = #tpu.core_type<tc>} {
    %0 = tpu.iota {dimensions = array<i32: 1>} : vector<16x100xi32>
    %c0 = arith.constant 0 : index
    %c0_0 = arith.constant 0 : index
    %1 = vector.load %arg0[%c0, %c0_0] : memref<16x1xi32, #tpu.memory_space<vmem>>, vector<16x1xi32>
    %2 = vector.broadcast %1 : vector<16x1xi32> to vector<16x100xi32>
    %3 = arith.cmpi eq, %2, %0 : vector<16x100xi32>
    %4 = arith.extui %3 : vector<16x100xi1> to vector<16x100xi32>
    %5 = arith.sitofp %4 : vector<16x100xi32> to vector<16x100xf32>
    %6 = tpu.iota {dimensions = array<i32: 1>} : vector<16x16xi32>
    %c0_1 = arith.constant 0 : index
    %c0_2 = arith.constant 0 : index
    %7 = vector.load %arg1[%c0_1, %c0_2] : memref<16x1xi32, #tpu.memory_space<vmem>>, vector<16x1xi32>
    %8 = vector.broadcast %7 : vector<16x1xi32> to vector<16x16xi32>
    %9 = arith.cmpi eq, %8, %6 : vector<16x16xi32>
    %10 = arith.extui %9 : vector<16x16xi1> to vector<16x16xi32>
    %11 = arith.sitofp %10 : vector<16x16xi32> to vector<16x16xf32>
    %c0_3 = arith.constant 0 : index
    %c0_4 = arith.constant 0 : index
    %12 = vector.load %arg3[%c0_3, %c0_4] : memref<100x32xf32, #tpu.memory_space<vmem>>, vector<100x32xf32>
    %cst = arith.constant dense<0.000000e+00> : vector<16x32xf32>
    %13 = tpu.matmul %5, %12, %cst {dimension_numbers = #tpu.dot_dimension_numbers<[1], [0], [0], [1], [0, 0, 1, 1], [], []>} : vector<16x100xf32>, vector<100x32xf32>, vector<16x32xf32> -> vector<16x32xf32>
    %c0_5 = arith.constant 0 : index
    %c0_6 = arith.constant 0 : index
    %14 = vector.load %arg4[%c0_5, %c0_6] : memref<16x32xf32, #tpu.memory_space<vmem>>, vector<16x32xf32>
    %cst_7 = arith.constant dense<0.000000e+00> : vector<16x32xf32>
    %15 = tpu.matmul %11, %14, %cst_7 {dimension_numbers = #tpu.dot_dimension_numbers<[1], [0], [0], [1], [0, 0, 1, 1], [], []>} : vector<16x16xf32>, vector<16x32xf32>, vector<16x32xf32> -> vector<16x32xf32>
    %16 = arith.addf %13, %15 : vector<16x32xf32>
    %c0_8 = arith.constant 0 : index
    %c0_9 = arith.constant 0 : index
    %17 = vector.load %arg5[%c0_8, %c0_9] : memref<2x32xf32, #tpu.memory_space<vmem>>, vector<1x32xf32>
    %18 = vector.broadcast %17 : vector<1x32xf32> to vector<16x32xf32>
    %19 = arith.addf %16, %18 : vector<16x32xf32>
    %c0_10 = arith.constant 0 : index
    %c0_11 = arith.constant 0 : index
    %20 = vector.load %arg6[%c0_10, %c0_11] : memref<1x32xf32, #tpu.memory_space<vmem>>, vector<1x32xf32>
    %c0_12 = arith.constant 0 : index
    %c0_13 = arith.constant 0 : index
    %21 = vector.load %arg7[%c0_12, %c0_13] : memref<1x32xf32, #tpu.memory_space<vmem>>, vector<1x32xf32>
    %cst_14 = arith.constant dense<0.000000e+00> : vector<16xf32>
    %22 = vector.multi_reduction <add>, %19, %cst_14 [1] : vector<16x32xf32> to vector<16xf32>
    %23 = vector.shape_cast %22 : vector<16xf32> to vector<16x1xf32>
    %cst_15 = arith.constant 3.200000e+01 : f32
    %24 = vector.broadcast %cst_15 : f32 to vector<16x1xf32>
    %25 = arith.divf %23, %24 : vector<16x1xf32>
    %26 = arith.mulf %19, %19 : vector<16x32xf32>
    %cst_16 = arith.constant dense<0.000000e+00> : vector<16xf32>
    %27 = vector.multi_reduction <add>, %26, %cst_16 [1] : vector<16x32xf32> to vector<16xf32>
    %28 = vector.shape_cast %27 : vector<16xf32> to vector<16x1xf32>
    %cst_17 = arith.constant 3.200000e+01 : f32
    %29 = vector.broadcast %cst_17 : f32 to vector<16x1xf32>
    %30 = arith.divf %28, %29 : vector<16x1xf32>
    %31 = arith.mulf %25, %25 : vector<16x1xf32>
    %32 = arith.subf %30, %31 : vector<16x1xf32>
    %33 = vector.broadcast %25 : vector<16x1xf32> to vector<16x32xf32>
    %34 = arith.subf %19, %33 : vector<16x32xf32>
    %cst_18 = arith.constant 9.99999996E-13 : f32
    %35 = vector.broadcast %cst_18 : f32 to vector<16x1xf32>
    %36 = arith.addf %32, %35 : vector<16x1xf32>
    %37 = math.rsqrt %36 : vector<16x1xf32>
    %38 = vector.broadcast %37 : vector<16x1xf32> to vector<16x32xf32>
    %39 = arith.mulf %34, %38 : vector<16x32xf32>
    %40 = vector.broadcast %20 : vector<1x32xf32> to vector<16x32xf32>
    %41 = arith.mulf %39, %40 : vector<16x32xf32>
    %42 = vector.broadcast %21 : vector<1x32xf32> to vector<16x32xf32>
    %43 = arith.addf %41, %42 : vector<16x32xf32>
    %c0_19 = arith.constant 0 : index
    %c0_20 = arith.constant 0 : index
    %c0_21 = arith.constant 0 : index
    %44 = vector.load %arg2[%c0_19, %c0_20, %c0_21] : memref<2x1x8xi32, #tpu.memory_space<vmem>>, vector<2x1x8xi32>
    %45 = arith.sitofp %44 : vector<2x1x8xi32> to vector<2x1x8xf32>
    %cst_22 = arith.constant 1.000000e+00 : f32
    %46 = vector.broadcast %cst_22 : f32 to vector<2x1x8xf32>
    %47 = arith.subf %46, %45 : vector<2x1x8xf32>
    %cst_23 = arith.constant -1.000000e+09 : f32
    %48 = vector.broadcast %cst_23 : f32 to vector<2x1x8xf32>
    %49 = arith.mulf %47, %48 : vector<2x1x8xf32>
    %c0_24 = arith.constant 0 : index
    %c0_25 = arith.constant 0 : index
    %c0_26 = arith.constant 0 : index
    %50 = vector.load %arg8[%c0_24, %c0_25, %c0_26] : memref<2x32x96xf32, #tpu.memory_space<vmem>>, vector<1x32x96xf32>
    %51 = vector.shape_cast %50 : vector<1x32x96xf32> to vector<32x96xf32>
    %52 = arith.truncf %43 : vector<16x32xf32> to vector<16x32xbf16>
    %53 = arith.truncf %51 : vector<32x96xf32> to vector<32x96xbf16>
    %cst_27 = arith.constant dense<0.000000e+00> : vector<16x96xf32>
    %54 = tpu.matmul %52, %53, %cst_27 {dimension_numbers = #tpu.dot_dimension_numbers<[1], [0], [0], [1], [0, 0, 1, 1], [], []>} : vector<16x32xbf16>, vector<32x96xbf16>, vector<16x96xf32> -> vector<16x96xf32>
    %c0_28 = arith.constant 0 : index
    %c0_29 = arith.constant 0 : index
    %c0_30 = arith.constant 0 : index
    %55 = vector.load %arg9[%c0_28, %c0_29, %c0_30] : memref<2x1x96xf32, #tpu.memory_space<vmem>>, vector<1x1x96xf32>
    %56 = vector.shape_cast %55 : vector<1x1x96xf32> to vector<1x96xf32>
    %57 = vector.broadcast %56 : vector<1x96xf32> to vector<16x96xf32>
    %58 = arith.addf %54, %57 : vector<16x96xf32>
    %59 = vector.extract_strided_slice %58 {offsets = [0, 0], sizes = [16, 16], strides = [1, 1]} : vector<16x96xf32> to vector<16x16xf32>
    %60 = vector.shape_cast %59 : vector<16x16xf32> to vector<2x8x16xf32>
    %61 = vector.extract_strided_slice %58 {offsets = [0, 32], sizes = [16, 16], strides = [1, 1]} : vector<16x96xf32> to vector<16x16xf32>
    %62 = vector.shape_cast %61 : vector<16x16xf32> to vector<2x8x16xf32>
    %63 = vector.extract_strided_slice %58 {offsets = [0, 64], sizes = [16, 16], strides = [1, 1]} : vector<16x96xf32> to vector<16x16xf32>
    %64 = vector.shape_cast %63 : vector<16x16xf32> to vector<2x8x16xf32>
    %65 = arith.truncf %60 : vector<2x8x16xf32> to vector<2x8x16xbf16>
    %66 = arith.truncf %62 : vector<2x8x16xf32> to vector<2x8x16xbf16>
    "tpu.trace_start"() <{level = 10 : i32, message = "bqd,bkd->bqk"}> : () -> ()
    %cst_31 = arith.constant dense<0.000000e+00> : vector<2x8x8xf32>
    %67 = tpu.matmul %65, %66, %cst_31 {dimension_numbers = #tpu.dot_dimension_numbers<[2], [2], [1], [1], [0, 0, 0, 1, 1, 1], [0], [0]>} : vector<2x8x16xbf16>, vector<2x8x16xbf16>, vector<2x8x8xf32> -> vector<2x8x8xf32>
    "tpu.trace_stop"() : () -> ()
    %68 = vector.broadcast %49 : vector<2x1x8xf32> to vector<2x8x8xf32>
    %69 = arith.addf %67, %68 : vector<2x8x8xf32>
    %cst_32 = arith.constant dense<0xFF800000> : vector<2x8xf32>
    %70 = vector.multi_reduction <maximumf>, %69, %cst_32 [2] : vector<2x8x8xf32> to vector<2x8xf32>
    %71 = vector.shape_cast %70 : vector<2x8xf32> to vector<2x8x1xf32>
    %72 = vector.broadcast %71 : vector<2x8x1xf32> to vector<2x8x8xf32>
    %73 = arith.subf %69, %72 : vector<2x8x8xf32>
    %74 = math.exp %73 : vector<2x8x8xf32>
    %cst_33 = arith.constant dense<0.000000e+00> : vector<2x8xf32>
    %75 = vector.multi_reduction <add>, %74, %cst_33 [2] : vector<2x8x8xf32> to vector<2x8xf32>
    %76 = vector.shape_cast %75 : vector<2x8xf32> to vector<2x8x1xf32>
    %77 = tpu.reciprocal %76 {approx = true} : vector<2x8x1xf32> -> vector<2x8x1xf32>
    %78 = vector.broadcast %77 : vector<2x8x1xf32> to vector<2x8x8xf32>
    %79 = arith.mulf %74, %78 : vector<2x8x8xf32>
    %80 = arith.truncf %79 : vector<2x8x8xf32> to vector<2x8x8xbf16>
    %81 = arith.truncf %64 : vector<2x8x16xf32> to vector<2x8x16xbf16>
    "tpu.trace_start"() <{level = 10 : i32, message = "bqk,bkd->bqd"}> : () -> ()
    %cst_34 = arith.constant dense<0.000000e+00> : vector<2x8x16xf32>
    %82 = tpu.matmul %80, %81, %cst_34 {dimension_numbers = #tpu.dot_dimension_numbers<[2], [1], [1], [2], [0, 0, 0, 1, 1, 2], [0], [0]>} : vector<2x8x8xbf16>, vector<2x8x16xbf16>, vector<2x8x16xf32> -> vector<2x8x16xf32>
    "tpu.trace_stop"() : () -> ()
    %83 = vector.shape_cast %82 : vector<2x8x16xf32> to vector<16x16xf32>
    %84 = vector.extract_strided_slice %58 {offsets = [0, 16], sizes = [16, 16], strides = [1, 1]} : vector<16x96xf32> to vector<16x16xf32>
    %85 = vector.shape_cast %84 : vector<16x16xf32> to vector<2x8x16xf32>
    %86 = vector.extract_strided_slice %58 {offsets = [0, 48], sizes = [16, 16], strides = [1, 1]} : vector<16x96xf32> to vector<16x16xf32>
    %87 = vector.shape_cast %86 : vector<16x16xf32> to vector<2x8x16xf32>
    %88 = vector.extract_strided_slice %58 {offsets = [0, 80], sizes = [16, 16], strides = [1, 1]} : vector<16x96xf32> to vector<16x16xf32>
    %89 = vector.shape_cast %88 : vector<16x16xf32> to vector<2x8x16xf32>
    %90 = arith.truncf %85 : vector<2x8x16xf32> to vector<2x8x16xbf16>
    %91 = arith.truncf %87 : vector<2x8x16xf32> to vector<2x8x16xbf16>
    "tpu.trace_start"() <{level = 10 : i32, message = "bqd,bkd->bqk"}> : () -> ()
    %cst_35 = arith.constant dense<0.000000e+00> : vector<2x8x8xf32>
    %92 = tpu.matmul %90, %91, %cst_35 {dimension_numbers = #tpu.dot_dimension_numbers<[2], [2], [1], [1], [0, 0, 0, 1, 1, 1], [0], [0]>} : vector<2x8x16xbf16>, vector<2x8x16xbf16>, vector<2x8x8xf32> -> vector<2x8x8xf32>
    "tpu.trace_stop"() : () -> ()
    %93 = vector.broadcast %49 : vector<2x1x8xf32> to vector<2x8x8xf32>
    %94 = arith.addf %92, %93 : vector<2x8x8xf32>
    %cst_36 = arith.constant dense<0xFF800000> : vector<2x8xf32>
    %95 = vector.multi_reduction <maximumf>, %94, %cst_36 [2] : vector<2x8x8xf32> to vector<2x8xf32>
    %96 = vector.shape_cast %95 : vector<2x8xf32> to vector<2x8x1xf32>
    %97 = vector.broadcast %96 : vector<2x8x1xf32> to vector<2x8x8xf32>
    %98 = arith.subf %94, %97 : vector<2x8x8xf32>
    %99 = math.exp %98 : vector<2x8x8xf32>
    %cst_37 = arith.constant dense<0.000000e+00> : vector<2x8xf32>
    %100 = vector.multi_reduction <add>, %99, %cst_37 [2] : vector<2x8x8xf32> to vector<2x8xf32>
    %101 = vector.shape_cast %100 : vector<2x8xf32> to vector<2x8x1xf32>
    %102 = tpu.reciprocal %101 {approx = true} : vector<2x8x1xf32> -> vector<2x8x1xf32>
    %103 = vector.broadcast %102 : vector<2x8x1xf32> to vector<2x8x8xf32>
    %104 = arith.mulf %99, %103 : vector<2x8x8xf32>
    %105 = arith.truncf %104 : vector<2x8x8xf32> to vector<2x8x8xbf16>
    %106 = arith.truncf %89 : vector<2x8x16xf32> to vector<2x8x16xbf16>
    "tpu.trace_start"() <{level = 10 : i32, message = "bqk,bkd->bqd"}> : () -> ()
    %cst_38 = arith.constant dense<0.000000e+00> : vector<2x8x16xf32>
    %107 = tpu.matmul %105, %106, %cst_38 {dimension_numbers = #tpu.dot_dimension_numbers<[2], [1], [1], [2], [0, 0, 0, 1, 1, 2], [0], [0]>} : vector<2x8x8xbf16>, vector<2x8x16xbf16>, vector<2x8x16xf32> -> vector<2x8x16xf32>
    "tpu.trace_stop"() : () -> ()
    %108 = vector.shape_cast %107 : vector<2x8x16xf32> to vector<16x16xf32>
    %109 = tpu.concatenate %83, %108 in 1 : vector<16x16xf32>, vector<16x16xf32> -> vector<16x32xf32>
    %c0_39 = arith.constant 0 : index
    %c0_40 = arith.constant 0 : index
    %c0_41 = arith.constant 0 : index
    %110 = vector.load %arg10[%c0_39, %c0_40, %c0_41] : memref<2x32x32xf32, #tpu.memory_space<vmem>>, vector<1x32x32xf32>
    %111 = vector.shape_cast %110 : vector<1x32x32xf32> to vector<32x32xf32>
    %112 = arith.truncf %109 : vector<16x32xf32> to vector<16x32xbf16>
    %113 = arith.truncf %111 : vector<32x32xf32> to vector<32x32xbf16>
    %cst_42 = arith.constant dense<0.000000e+00> : vector<16x32xf32>
    %114 = tpu.matmul %112, %113, %cst_42 {dimension_numbers = #tpu.dot_dimension_numbers<[1], [0], [0], [1], [0, 0, 1, 1], [], []>} : vector<16x32xbf16>, vector<32x32xbf16>, vector<16x32xf32> -> vector<16x32xf32>
    %c0_43 = arith.constant 0 : index
    %c0_44 = arith.constant 0 : index
    %c0_45 = arith.constant 0 : index
    %115 = vector.load %arg11[%c0_43, %c0_44, %c0_45] : memref<2x1x32xf32, #tpu.memory_space<vmem>>, vector<1x1x32xf32>
    %116 = vector.shape_cast %115 : vector<1x1x32xf32> to vector<1x32xf32>
    %117 = vector.broadcast %116 : vector<1x32xf32> to vector<16x32xf32>
    %118 = arith.addf %114, %117 : vector<16x32xf32>
    %119 = arith.addf %118, %43 : vector<16x32xf32>
    %c0_46 = arith.constant 0 : index
    %c0_47 = arith.constant 0 : index
    %c0_48 = arith.constant 0 : index
    %120 = vector.load %arg12[%c0_46, %c0_47, %c0_48] : memref<2x1x32xf32, #tpu.memory_space<vmem>>, vector<1x1x32xf32>
    %121 = vector.shape_cast %120 : vector<1x1x32xf32> to vector<1x32xf32>
    %c0_49 = arith.constant 0 : index
    %c0_50 = arith.constant 0 : index
    %c0_51 = arith.constant 0 : index
    %122 = vector.load %arg13[%c0_49, %c0_50, %c0_51] : memref<2x1x32xf32, #tpu.memory_space<vmem>>, vector<1x1x32xf32>
    %123 = vector.shape_cast %122 : vector<1x1x32xf32> to vector<1x32xf32>
    %cst_52 = arith.constant dense<0.000000e+00> : vector<16xf32>
    %124 = vector.multi_reduction <add>, %119, %cst_52 [1] : vector<16x32xf32> to vector<16xf32>
    %125 = vector.shape_cast %124 : vector<16xf32> to vector<16x1xf32>
    %cst_53 = arith.constant 3.200000e+01 : f32
    %126 = vector.broadcast %cst_53 : f32 to vector<16x1xf32>
    %127 = arith.divf %125, %126 : vector<16x1xf32>
    %128 = arith.mulf %119, %119 : vector<16x32xf32>
    %cst_54 = arith.constant dense<0.000000e+00> : vector<16xf32>
    %129 = vector.multi_reduction <add>, %128, %cst_54 [1] : vector<16x32xf32> to vector<16xf32>
    %130 = vector.shape_cast %129 : vector<16xf32> to vector<16x1xf32>
    %cst_55 = arith.constant 3.200000e+01 : f32
    %131 = vector.broadcast %cst_55 : f32 to vector<16x1xf32>
    %132 = arith.divf %130, %131 : vector<16x1xf32>
    %133 = arith.mulf %127, %127 : vector<16x1xf32>
    %134 = arith.subf %132, %133 : vector<16x1xf32>
    %135 = vector.broadcast %127 : vector<16x1xf32> to vector<16x32xf32>
    %136 = arith.subf %119, %135 : vector<16x32xf32>
    %cst_56 = arith.constant 9.99999996E-13 : f32
    %137 = vector.broadcast %cst_56 : f32 to vector<16x1xf32>
    %138 = arith.addf %134, %137 : vector<16x1xf32>
    %139 = math.rsqrt %138 : vector<16x1xf32>
    %140 = vector.broadcast %139 : vector<16x1xf32> to vector<16x32xf32>
    %141 = arith.mulf %136, %140 : vector<16x32xf32>
    %142 = vector.broadcast %121 : vector<1x32xf32> to vector<16x32xf32>
    %143 = arith.mulf %141, %142 : vector<16x32xf32>
    %144 = vector.broadcast %123 : vector<1x32xf32> to vector<16x32xf32>
    %145 = arith.addf %143, %144 : vector<16x32xf32>
    %c0_57 = arith.constant 0 : index
    %c0_58 = arith.constant 0 : index
    %c0_59 = arith.constant 0 : index
    %146 = vector.load %arg14[%c0_57, %c0_58, %c0_59] : memref<2x32x64xf32, #tpu.memory_space<vmem>>, vector<1x32x64xf32>
    %147 = vector.shape_cast %146 : vector<1x32x64xf32> to vector<32x64xf32>
    %148 = arith.truncf %145 : vector<16x32xf32> to vector<16x32xbf16>
    %149 = arith.truncf %147 : vector<32x64xf32> to vector<32x64xbf16>
    %cst_60 = arith.constant dense<0.000000e+00> : vector<16x64xf32>
    %150 = tpu.matmul %148, %149, %cst_60 {dimension_numbers = #tpu.dot_dimension_numbers<[1], [0], [0], [1], [0, 0, 1, 1], [], []>} : vector<16x32xbf16>, vector<32x64xbf16>, vector<16x64xf32> -> vector<16x64xf32>
    %c0_61 = arith.constant 0 : index
    %c0_62 = arith.constant 0 : index
    %c0_63 = arith.constant 0 : index
    %151 = vector.load %arg15[%c0_61, %c0_62, %c0_63] : memref<2x1x64xf32, #tpu.memory_space<vmem>>, vector<1x1x64xf32>
    %152 = vector.shape_cast %151 : vector<1x1x64xf32> to vector<1x64xf32>
    %153 = vector.broadcast %152 : vector<1x64xf32> to vector<16x64xf32>
    %154 = arith.addf %150, %153 : vector<16x64xf32>
    %155 = arith.mulf %154, %154 : vector<16x64xf32>
    %156 = arith.mulf %154, %155 : vector<16x64xf32>
    %cst_64 = arith.constant 4.471500e-02 : f32
    %157 = vector.broadcast %cst_64 : f32 to vector<16x64xf32>
    %158 = arith.mulf %157, %156 : vector<16x64xf32>
    %159 = arith.addf %154, %158 : vector<16x64xf32>
    %cst_65 = arith.constant 0.797884583 : f32
    %160 = vector.broadcast %cst_65 : f32 to vector<16x64xf32>
    %161 = arith.mulf %160, %159 : vector<16x64xf32>
    %162 = math.tanh %161 : vector<16x64xf32>
    %cst_66 = arith.constant 1.000000e+00 : f32
    %163 = vector.broadcast %cst_66 : f32 to vector<16x64xf32>
    %164 = arith.addf %163, %162 : vector<16x64xf32>
    %cst_67 = arith.constant 5.000000e-01 : f32
    %165 = vector.broadcast %cst_67 : f32 to vector<16x64xf32>
    %166 = arith.mulf %165, %164 : vector<16x64xf32>
    %167 = arith.mulf %154, %166 : vector<16x64xf32>
    %c0_68 = arith.constant 0 : index
    %c0_69 = arith.constant 0 : index
    %c0_70 = arith.constant 0 : index
    %168 = vector.load %arg16[%c0_68, %c0_69, %c0_70] : memref<2x64x32xf32, #tpu.memory_space<vmem>>, vector<1x64x32xf32>
    %169 = vector.shape_cast %168 : vector<1x64x32xf32> to vector<64x32xf32>
    %170 = arith.truncf %167 : vector<16x64xf32> to vector<16x64xbf16>
    %171 = arith.truncf %169 : vector<64x32xf32> to vector<64x32xbf16>
    %cst_71 = arith.constant dense<0.000000e+00> : vector<16x32xf32>
    %172 = tpu.matmul %170, %171, %cst_71 {dimension_numbers = #tpu.dot_dimension_numbers<[1], [0], [0], [1], [0, 0, 1, 1], [], []>} : vector<16x64xbf16>, vector<64x32xbf16>, vector<16x32xf32> -> vector<16x32xf32>
    %c0_72 = arith.constant 0 : index
    %c0_73 = arith.constant 0 : index
    %c0_74 = arith.constant 0 : index
    %173 = vector.load %arg17[%c0_72, %c0_73, %c0_74] : memref<2x1x32xf32, #tpu.memory_space<vmem>>, vector<1x1x32xf32>
    %174 = vector.shape_cast %173 : vector<1x1x32xf32> to vector<1x32xf32>
    %175 = vector.broadcast %174 : vector<1x32xf32> to vector<16x32xf32>
    %176 = arith.addf %172, %175 : vector<16x32xf32>
    %177 = arith.addf %176, %145 : vector<16x32xf32>
    %c0_75 = arith.constant 0 : index
    %c0_76 = arith.constant 0 : index
    %c0_77 = arith.constant 0 : index
    %178 = vector.load %arg18[%c0_75, %c0_76, %c0_77] : memref<2x1x32xf32, #tpu.memory_space<vmem>>, vector<1x1x32xf32>
    %179 = vector.shape_cast %178 : vector<1x1x32xf32> to vector<1x32xf32>
    %c0_78 = arith.constant 0 : index
    %c0_79 = arith.constant 0 : index
    %c0_80 = arith.constant 0 : index
    %180 = vector.load %arg19[%c0_78, %c0_79, %c0_80] : memref<2x1x32xf32, #tpu.memory_space<vmem>>, vector<1x1x32xf32>
    %181 = vector.shape_cast %180 : vector<1x1x32xf32> to vector<1x32xf32>
    %cst_81 = arith.constant dense<0.000000e+00> : vector<16xf32>
    %182 = vector.multi_reduction <add>, %177, %cst_81 [1] : vector<16x32xf32> to vector<16xf32>
    %183 = vector.shape_cast %182 : vector<16xf32> to vector<16x1xf32>
    %cst_82 = arith.constant 3.200000e+01 : f32
    %184 = vector.broadcast %cst_82 : f32 to vector<16x1xf32>
    %185 = arith.divf %183, %184 : vector<16x1xf32>
    %186 = arith.mulf %177, %177 : vector<16x32xf32>
    %cst_83 = arith.constant dense<0.000000e+00> : vector<16xf32>
    %187 = vector.multi_reduction <add>, %186, %cst_83 [1] : vector<16x32xf32> to vector<16xf32>
    %188 = vector.shape_cast %187 : vector<16xf32> to vector<16x1xf32>
    %cst_84 = arith.constant 3.200000e+01 : f32
    %189 = vector.broadcast %cst_84 : f32 to vector<16x1xf32>
    %190 = arith.divf %188, %189 : vector<16x1xf32>
    %191 = arith.mulf %185, %185 : vector<16x1xf32>
    %192 = arith.subf %190, %191 : vector<16x1xf32>
    %193 = vector.broadcast %185 : vector<16x1xf32> to vector<16x32xf32>
    %194 = arith.subf %177, %193 : vector<16x32xf32>
    %cst_85 = arith.constant 9.99999996E-13 : f32
    %195 = vector.broadcast %cst_85 : f32 to vector<16x1xf32>
    %196 = arith.addf %192, %195 : vector<16x1xf32>
    %197 = math.rsqrt %196 : vector<16x1xf32>
    %198 = vector.broadcast %197 : vector<16x1xf32> to vector<16x32xf32>
    %199 = arith.mulf %194, %198 : vector<16x32xf32>
    %200 = vector.broadcast %179 : vector<1x32xf32> to vector<16x32xf32>
    %201 = arith.mulf %199, %200 : vector<16x32xf32>
    %202 = vector.broadcast %181 : vector<1x32xf32> to vector<16x32xf32>
    %203 = arith.addf %201, %202 : vector<16x32xf32>
    %c1 = arith.constant 1 : index
    %c0_86 = arith.constant 0 : index
    %c0_87 = arith.constant 0 : index
    %204 = vector.load %arg8[%c1, %c0_86, %c0_87] : memref<2x32x96xf32, #tpu.memory_space<vmem>>, vector<1x32x96xf32>
    %205 = vector.shape_cast %204 : vector<1x32x96xf32> to vector<32x96xf32>
    %206 = arith.truncf %203 : vector<16x32xf32> to vector<16x32xbf16>
    %207 = arith.truncf %205 : vector<32x96xf32> to vector<32x96xbf16>
    %cst_88 = arith.constant dense<0.000000e+00> : vector<16x96xf32>
    %208 = tpu.matmul %206, %207, %cst_88 {dimension_numbers = #tpu.dot_dimension_numbers<[1], [0], [0], [1], [0, 0, 1, 1], [], []>} : vector<16x32xbf16>, vector<32x96xbf16>, vector<16x96xf32> -> vector<16x96xf32>
    %c1_89 = arith.constant 1 : index
    %c0_90 = arith.constant 0 : index
    %c0_91 = arith.constant 0 : index
    %209 = vector.load %arg9[%c1_89, %c0_90, %c0_91] : memref<2x1x96xf32, #tpu.memory_space<vmem>>, vector<1x1x96xf32>
    %210 = vector.shape_cast %209 : vector<1x1x96xf32> to vector<1x96xf32>
    %211 = vector.broadcast %210 : vector<1x96xf32> to vector<16x96xf32>
    %212 = arith.addf %208, %211 : vector<16x96xf32>
    %213 = vector.extract_strided_slice %212 {offsets = [0, 0], sizes = [16, 16], strides = [1, 1]} : vector<16x96xf32> to vector<16x16xf32>
    %214 = vector.shape_cast %213 : vector<16x16xf32> to vector<2x8x16xf32>
    %215 = vector.extract_strided_slice %212 {offsets = [0, 32], sizes = [16, 16], strides = [1, 1]} : vector<16x96xf32> to vector<16x16xf32>
    %216 = vector.shape_cast %215 : vector<16x16xf32> to vector<2x8x16xf32>
    %217 = vector.extract_strided_slice %212 {offsets = [0, 64], sizes = [16, 16], strides = [1, 1]} : vector<16x96xf32> to vector<16x16xf32>
    %218 = vector.shape_cast %217 : vector<16x16xf32> to vector<2x8x16xf32>
    %219 = arith.truncf %214 : vector<2x8x16xf32> to vector<2x8x16xbf16>
    %220 = arith.truncf %216 : vector<2x8x16xf32> to vector<2x8x16xbf16>
    "tpu.trace_start"() <{level = 10 : i32, message = "bqd,bkd->bqk"}> : () -> ()
    %cst_92 = arith.constant dense<0.000000e+00> : vector<2x8x8xf32>
    %221 = tpu.matmul %219, %220, %cst_92 {dimension_numbers = #tpu.dot_dimension_numbers<[2], [2], [1], [1], [0, 0, 0, 1, 1, 1], [0], [0]>} : vector<2x8x16xbf16>, vector<2x8x16xbf16>, vector<2x8x8xf32> -> vector<2x8x8xf32>
    "tpu.trace_stop"() : () -> ()
    %222 = vector.broadcast %49 : vector<2x1x8xf32> to vector<2x8x8xf32>
    %223 = arith.addf %221, %222 : vector<2x8x8xf32>
    %cst_93 = arith.constant dense<0xFF800000> : vector<2x8xf32>
    %224 = vector.multi_reduction <maximumf>, %223, %cst_93 [2] : vector<2x8x8xf32> to vector<2x8xf32>
    %225 = vector.shape_cast %224 : vector<2x8xf32> to vector<2x8x1xf32>
    %226 = vector.broadcast %225 : vector<2x8x1xf32> to vector<2x8x8xf32>
    %227 = arith.subf %223, %226 : vector<2x8x8xf32>
    %228 = math.exp %227 : vector<2x8x8xf32>
    %cst_94 = arith.constant dense<0.000000e+00> : vector<2x8xf32>
    %229 = vector.multi_reduction <add>, %228, %cst_94 [2] : vector<2x8x8xf32> to vector<2x8xf32>
    %230 = vector.shape_cast %229 : vector<2x8xf32> to vector<2x8x1xf32>
    %231 = tpu.reciprocal %230 {approx = true} : vector<2x8x1xf32> -> vector<2x8x1xf32>
    %232 = vector.broadcast %231 : vector<2x8x1xf32> to vector<2x8x8xf32>
    %233 = arith.mulf %228, %232 : vector<2x8x8xf32>
    %234 = arith.truncf %233 : vector<2x8x8xf32> to vector<2x8x8xbf16>
    %235 = arith.truncf %218 : vector<2x8x16xf32> to vector<2x8x16xbf16>
    "tpu.trace_start"() <{level = 10 : i32, message = "bqk,bkd->bqd"}> : () -> ()
    %cst_95 = arith.constant dense<0.000000e+00> : vector<2x8x16xf32>
    %236 = tpu.matmul %234, %235, %cst_95 {dimension_numbers = #tpu.dot_dimension_numbers<[2], [1], [1], [2], [0, 0, 0, 1, 1, 2], [0], [0]>} : vector<2x8x8xbf16>, vector<2x8x16xbf16>, vector<2x8x16xf32> -> vector<2x8x16xf32>
    "tpu.trace_stop"() : () -> ()
    %237 = vector.shape_cast %236 : vector<2x8x16xf32> to vector<16x16xf32>
    %238 = vector.extract_strided_slice %212 {offsets = [0, 16], sizes = [16, 16], strides = [1, 1]} : vector<16x96xf32> to vector<16x16xf32>
    %239 = vector.shape_cast %238 : vector<16x16xf32> to vector<2x8x16xf32>
    %240 = vector.extract_strided_slice %212 {offsets = [0, 48], sizes = [16, 16], strides = [1, 1]} : vector<16x96xf32> to vector<16x16xf32>
    %241 = vector.shape_cast %240 : vector<16x16xf32> to vector<2x8x16xf32>
    %242 = vector.extract_strided_slice %212 {offsets = [0, 80], sizes = [16, 16], strides = [1, 1]} : vector<16x96xf32> to vector<16x16xf32>
    %243 = vector.shape_cast %242 : vector<16x16xf32> to vector<2x8x16xf32>
    %244 = arith.truncf %239 : vector<2x8x16xf32> to vector<2x8x16xbf16>
    %245 = arith.truncf %241 : vector<2x8x16xf32> to vector<2x8x16xbf16>
    "tpu.trace_start"() <{level = 10 : i32, message = "bqd,bkd->bqk"}> : () -> ()
    %cst_96 = arith.constant dense<0.000000e+00> : vector<2x8x8xf32>
    %246 = tpu.matmul %244, %245, %cst_96 {dimension_numbers = #tpu.dot_dimension_numbers<[2], [2], [1], [1], [0, 0, 0, 1, 1, 1], [0], [0]>} : vector<2x8x16xbf16>, vector<2x8x16xbf16>, vector<2x8x8xf32> -> vector<2x8x8xf32>
    "tpu.trace_stop"() : () -> ()
    %247 = vector.broadcast %49 : vector<2x1x8xf32> to vector<2x8x8xf32>
    %248 = arith.addf %246, %247 : vector<2x8x8xf32>
    %cst_97 = arith.constant dense<0xFF800000> : vector<2x8xf32>
    %249 = vector.multi_reduction <maximumf>, %248, %cst_97 [2] : vector<2x8x8xf32> to vector<2x8xf32>
    %250 = vector.shape_cast %249 : vector<2x8xf32> to vector<2x8x1xf32>
    %251 = vector.broadcast %250 : vector<2x8x1xf32> to vector<2x8x8xf32>
    %252 = arith.subf %248, %251 : vector<2x8x8xf32>
    %253 = math.exp %252 : vector<2x8x8xf32>
    %cst_98 = arith.constant dense<0.000000e+00> : vector<2x8xf32>
    %254 = vector.multi_reduction <add>, %253, %cst_98 [2] : vector<2x8x8xf32> to vector<2x8xf32>
    %255 = vector.shape_cast %254 : vector<2x8xf32> to vector<2x8x1xf32>
    %256 = tpu.reciprocal %255 {approx = true} : vector<2x8x1xf32> -> vector<2x8x1xf32>
    %257 = vector.broadcast %256 : vector<2x8x1xf32> to vector<2x8x8xf32>
    %258 = arith.mulf %253, %257 : vector<2x8x8xf32>
    %259 = arith.truncf %258 : vector<2x8x8xf32> to vector<2x8x8xbf16>
    %260 = arith.truncf %243 : vector<2x8x16xf32> to vector<2x8x16xbf16>
    "tpu.trace_start"() <{level = 10 : i32, message = "bqk,bkd->bqd"}> : () -> ()
    %cst_99 = arith.constant dense<0.000000e+00> : vector<2x8x16xf32>
    %261 = tpu.matmul %259, %260, %cst_99 {dimension_numbers = #tpu.dot_dimension_numbers<[2], [1], [1], [2], [0, 0, 0, 1, 1, 2], [0], [0]>} : vector<2x8x8xbf16>, vector<2x8x16xbf16>, vector<2x8x16xf32> -> vector<2x8x16xf32>
    "tpu.trace_stop"() : () -> ()
    %262 = vector.shape_cast %261 : vector<2x8x16xf32> to vector<16x16xf32>
    %263 = tpu.concatenate %237, %262 in 1 : vector<16x16xf32>, vector<16x16xf32> -> vector<16x32xf32>
    %c1_100 = arith.constant 1 : index
    %c0_101 = arith.constant 0 : index
    %c0_102 = arith.constant 0 : index
    %264 = vector.load %arg10[%c1_100, %c0_101, %c0_102] : memref<2x32x32xf32, #tpu.memory_space<vmem>>, vector<1x32x32xf32>
    %265 = vector.shape_cast %264 : vector<1x32x32xf32> to vector<32x32xf32>
    %266 = arith.truncf %263 : vector<16x32xf32> to vector<16x32xbf16>
    %267 = arith.truncf %265 : vector<32x32xf32> to vector<32x32xbf16>
    %cst_103 = arith.constant dense<0.000000e+00> : vector<16x32xf32>
    %268 = tpu.matmul %266, %267, %cst_103 {dimension_numbers = #tpu.dot_dimension_numbers<[1], [0], [0], [1], [0, 0, 1, 1], [], []>} : vector<16x32xbf16>, vector<32x32xbf16>, vector<16x32xf32> -> vector<16x32xf32>
    %c1_104 = arith.constant 1 : index
    %c0_105 = arith.constant 0 : index
    %c0_106 = arith.constant 0 : index
    %269 = vector.load %arg11[%c1_104, %c0_105, %c0_106] : memref<2x1x32xf32, #tpu.memory_space<vmem>>, vector<1x1x32xf32>
    %270 = vector.shape_cast %269 : vector<1x1x32xf32> to vector<1x32xf32>
    %271 = vector.broadcast %270 : vector<1x32xf32> to vector<16x32xf32>
    %272 = arith.addf %268, %271 : vector<16x32xf32>
    %273 = arith.addf %272, %203 : vector<16x32xf32>
    %c1_107 = arith.constant 1 : index
    %c0_108 = arith.constant 0 : index
    %c0_109 = arith.constant 0 : index
    %274 = vector.load %arg12[%c1_107, %c0_108, %c0_109] : memref<2x1x32xf32, #tpu.memory_space<vmem>>, vector<1x1x32xf32>
    %275 = vector.shape_cast %274 : vector<1x1x32xf32> to vector<1x32xf32>
    %c1_110 = arith.constant 1 : index
    %c0_111 = arith.constant 0 : index
    %c0_112 = arith.constant 0 : index
    %276 = vector.load %arg13[%c1_110, %c0_111, %c0_112] : memref<2x1x32xf32, #tpu.memory_space<vmem>>, vector<1x1x32xf32>
    %277 = vector.shape_cast %276 : vector<1x1x32xf32> to vector<1x32xf32>
    %cst_113 = arith.constant dense<0.000000e+00> : vector<16xf32>
    %278 = vector.multi_reduction <add>, %273, %cst_113 [1] : vector<16x32xf32> to vector<16xf32>
    %279 = vector.shape_cast %278 : vector<16xf32> to vector<16x1xf32>
    %cst_114 = arith.constant 3.200000e+01 : f32
    %280 = vector.broadcast %cst_114 : f32 to vector<16x1xf32>
    %281 = arith.divf %279, %280 : vector<16x1xf32>
    %282 = arith.mulf %273, %273 : vector<16x32xf32>
    %cst_115 = arith.constant dense<0.000000e+00> : vector<16xf32>
    %283 = vector.multi_reduction <add>, %282, %cst_115 [1] : vector<16x32xf32> to vector<16xf32>
    %284 = vector.shape_cast %283 : vector<16xf32> to vector<16x1xf32>
    %cst_116 = arith.constant 3.200000e+01 : f32
    %285 = vector.broadcast %cst_116 : f32 to vector<16x1xf32>
    %286 = arith.divf %284, %285 : vector<16x1xf32>
    %287 = arith.mulf %281, %281 : vector<16x1xf32>
    %288 = arith.subf %286, %287 : vector<16x1xf32>
    %289 = vector.broadcast %281 : vector<16x1xf32> to vector<16x32xf32>
    %290 = arith.subf %273, %289 : vector<16x32xf32>
    %cst_117 = arith.constant 9.99999996E-13 : f32
    %291 = vector.broadcast %cst_117 : f32 to vector<16x1xf32>
    %292 = arith.addf %288, %291 : vector<16x1xf32>
    %293 = math.rsqrt %292 : vector<16x1xf32>
    %294 = vector.broadcast %293 : vector<16x1xf32> to vector<16x32xf32>
    %295 = arith.mulf %290, %294 : vector<16x32xf32>
    %296 = vector.broadcast %275 : vector<1x32xf32> to vector<16x32xf32>
    %297 = arith.mulf %295, %296 : vector<16x32xf32>
    %298 = vector.broadcast %277 : vector<1x32xf32> to vector<16x32xf32>
    %299 = arith.addf %297, %298 : vector<16x32xf32>
    %c1_118 = arith.constant 1 : index
    %c0_119 = arith.constant 0 : index
    %c0_120 = arith.constant 0 : index
    %300 = vector.load %arg14[%c1_118, %c0_119, %c0_120] : memref<2x32x64xf32, #tpu.memory_space<vmem>>, vector<1x32x64xf32>
    %301 = vector.shape_cast %300 : vector<1x32x64xf32> to vector<32x64xf32>
    %302 = arith.truncf %299 : vector<16x32xf32> to vector<16x32xbf16>
    %303 = arith.truncf %301 : vector<32x64xf32> to vector<32x64xbf16>
    %cst_121 = arith.constant dense<0.000000e+00> : vector<16x64xf32>
    %304 = tpu.matmul %302, %303, %cst_121 {dimension_numbers = #tpu.dot_dimension_numbers<[1], [0], [0], [1], [0, 0, 1, 1], [], []>} : vector<16x32xbf16>, vector<32x64xbf16>, vector<16x64xf32> -> vector<16x64xf32>
    %c1_122 = arith.constant 1 : index
    %c0_123 = arith.constant 0 : index
    %c0_124 = arith.constant 0 : index
    %305 = vector.load %arg15[%c1_122, %c0_123, %c0_124] : memref<2x1x64xf32, #tpu.memory_space<vmem>>, vector<1x1x64xf32>
    %306 = vector.shape_cast %305 : vector<1x1x64xf32> to vector<1x64xf32>
    %307 = vector.broadcast %306 : vector<1x64xf32> to vector<16x64xf32>
    %308 = arith.addf %304, %307 : vector<16x64xf32>
    %309 = arith.mulf %308, %308 : vector<16x64xf32>
    %310 = arith.mulf %308, %309 : vector<16x64xf32>
    %cst_125 = arith.constant 4.471500e-02 : f32
    %311 = vector.broadcast %cst_125 : f32 to vector<16x64xf32>
    %312 = arith.mulf %311, %310 : vector<16x64xf32>
    %313 = arith.addf %308, %312 : vector<16x64xf32>
    %cst_126 = arith.constant 0.797884583 : f32
    %314 = vector.broadcast %cst_126 : f32 to vector<16x64xf32>
    %315 = arith.mulf %314, %313 : vector<16x64xf32>
    %316 = math.tanh %315 : vector<16x64xf32>
    %cst_127 = arith.constant 1.000000e+00 : f32
    %317 = vector.broadcast %cst_127 : f32 to vector<16x64xf32>
    %318 = arith.addf %317, %316 : vector<16x64xf32>
    %cst_128 = arith.constant 5.000000e-01 : f32
    %319 = vector.broadcast %cst_128 : f32 to vector<16x64xf32>
    %320 = arith.mulf %319, %318 : vector<16x64xf32>
    %321 = arith.mulf %308, %320 : vector<16x64xf32>
    %c1_129 = arith.constant 1 : index
    %c0_130 = arith.constant 0 : index
    %c0_131 = arith.constant 0 : index
    %322 = vector.load %arg16[%c1_129, %c0_130, %c0_131] : memref<2x64x32xf32, #tpu.memory_space<vmem>>, vector<1x64x32xf32>
    %323 = vector.shape_cast %322 : vector<1x64x32xf32> to vector<64x32xf32>
    %324 = arith.truncf %321 : vector<16x64xf32> to vector<16x64xbf16>
    %325 = arith.truncf %323 : vector<64x32xf32> to vector<64x32xbf16>
    %cst_132 = arith.constant dense<0.000000e+00> : vector<16x32xf32>
    %326 = tpu.matmul %324, %325, %cst_132 {dimension_numbers = #tpu.dot_dimension_numbers<[1], [0], [0], [1], [0, 0, 1, 1], [], []>} : vector<16x64xbf16>, vector<64x32xbf16>, vector<16x32xf32> -> vector<16x32xf32>
    %c1_133 = arith.constant 1 : index
    %c0_134 = arith.constant 0 : index
    %c0_135 = arith.constant 0 : index
    %327 = vector.load %arg17[%c1_133, %c0_134, %c0_135] : memref<2x1x32xf32, #tpu.memory_space<vmem>>, vector<1x1x32xf32>
    %328 = vector.shape_cast %327 : vector<1x1x32xf32> to vector<1x32xf32>
    %329 = vector.broadcast %328 : vector<1x32xf32> to vector<16x32xf32>
    %330 = arith.addf %326, %329 : vector<16x32xf32>
    %331 = arith.addf %330, %299 : vector<16x32xf32>
    %c1_136 = arith.constant 1 : index
    %c0_137 = arith.constant 0 : index
    %c0_138 = arith.constant 0 : index
    %332 = vector.load %arg18[%c1_136, %c0_137, %c0_138] : memref<2x1x32xf32, #tpu.memory_space<vmem>>, vector<1x1x32xf32>
    %333 = vector.shape_cast %332 : vector<1x1x32xf32> to vector<1x32xf32>
    %c1_139 = arith.constant 1 : index
    %c0_140 = arith.constant 0 : index
    %c0_141 = arith.constant 0 : index
    %334 = vector.load %arg19[%c1_139, %c0_140, %c0_141] : memref<2x1x32xf32, #tpu.memory_space<vmem>>, vector<1x1x32xf32>
    %335 = vector.shape_cast %334 : vector<1x1x32xf32> to vector<1x32xf32>
    %cst_142 = arith.constant dense<0.000000e+00> : vector<16xf32>
    %336 = vector.multi_reduction <add>, %331, %cst_142 [1] : vector<16x32xf32> to vector<16xf32>
    %337 = vector.shape_cast %336 : vector<16xf32> to vector<16x1xf32>
    %cst_143 = arith.constant 3.200000e+01 : f32
    %338 = vector.broadcast %cst_143 : f32 to vector<16x1xf32>
    %339 = arith.divf %337, %338 : vector<16x1xf32>
    %340 = arith.mulf %331, %331 : vector<16x32xf32>
    %cst_144 = arith.constant dense<0.000000e+00> : vector<16xf32>
    %341 = vector.multi_reduction <add>, %340, %cst_144 [1] : vector<16x32xf32> to vector<16xf32>
    %342 = vector.shape_cast %341 : vector<16xf32> to vector<16x1xf32>
    %cst_145 = arith.constant 3.200000e+01 : f32
    %343 = vector.broadcast %cst_145 : f32 to vector<16x1xf32>
    %344 = arith.divf %342, %343 : vector<16x1xf32>
    %345 = arith.mulf %339, %339 : vector<16x1xf32>
    %346 = arith.subf %344, %345 : vector<16x1xf32>
    %347 = vector.broadcast %339 : vector<16x1xf32> to vector<16x32xf32>
    %348 = arith.subf %331, %347 : vector<16x32xf32>
    %cst_146 = arith.constant 9.99999996E-13 : f32
    %349 = vector.broadcast %cst_146 : f32 to vector<16x1xf32>
    %350 = arith.addf %346, %349 : vector<16x1xf32>
    %351 = math.rsqrt %350 : vector<16x1xf32>
    %352 = vector.broadcast %351 : vector<16x1xf32> to vector<16x32xf32>
    %353 = arith.mulf %348, %352 : vector<16x32xf32>
    %354 = vector.broadcast %333 : vector<1x32xf32> to vector<16x32xf32>
    %355 = arith.mulf %353, %354 : vector<16x32xf32>
    %356 = vector.broadcast %335 : vector<1x32xf32> to vector<16x32xf32>
    %357 = arith.addf %355, %356 : vector<16x32xf32>
    %358 = vector.shape_cast %357 : vector<16x32xf32> to vector<2x8x32xf32>
    %359 = vector.extract_strided_slice %358 {offsets = [0, 0, 0], sizes = [2, 1, 32], strides = [1, 1, 1]} : vector<2x8x32xf32> to vector<2x1x32xf32>
    %360 = vector.shape_cast %359 : vector<2x1x32xf32> to vector<2x32xf32>
    %c0_147 = arith.constant 0 : index
    %c0_148 = arith.constant 0 : index
    %361 = vector.load %arg20[%c0_147, %c0_148] : memref<32x32xf32, #tpu.memory_space<vmem>>, vector<32x32xf32>
    %362 = arith.truncf %360 : vector<2x32xf32> to vector<2x32xbf16>
    %363 = arith.truncf %361 : vector<32x32xf32> to vector<32x32xbf16>
    %cst_149 = arith.constant dense<0.000000e+00> : vector<2x32xf32>
    %364 = tpu.matmul %362, %363, %cst_149 {dimension_numbers = #tpu.dot_dimension_numbers<[1], [0], [0], [1], [0, 0, 1, 1], [], []>} : vector<2x32xbf16>, vector<32x32xbf16>, vector<2x32xf32> -> vector<2x32xf32>
    %c0_150 = arith.constant 0 : index
    %c0_151 = arith.constant 0 : index
    %365 = vector.load %arg21[%c0_150, %c0_151] : memref<1x32xf32, #tpu.memory_space<vmem>>, vector<1x32xf32>
    %366 = vector.broadcast %365 : vector<1x32xf32> to vector<2x32xf32>
    %367 = arith.addf %364, %366 : vector<2x32xf32>
    %368 = math.tanh %367 : vector<2x32xf32>
    %c0_152 = arith.constant 0 : index
    %c0_153 = arith.constant 0 : index
    %369 = vector.load %arg22[%c0_152, %c0_153] : memref<32x1xf32, #tpu.memory_space<vmem>>, vector<32x1xf32>
    %370 = arith.truncf %368 : vector<2x32xf32> to vector<2x32xbf16>
    %371 = arith.truncf %369 : vector<32x1xf32> to vector<32x1xbf16>
    %cst_154 = arith.constant dense<0.000000e+00> : vector<2x1xf32>
    %372 = tpu.matmul %370, %371, %cst_154 {dimension_numbers = #tpu.dot_dimension_numbers<[1], [0], [0], [1], [0, 0, 1, 1], [], []>} : vector<2x32xbf16>, vector<32x1xbf16>, vector<2x1xf32> -> vector<2x1xf32>
    %c0_155 = arith.constant 0 : index
    %c0_156 = arith.constant 0 : index
    %373 = vector.load %arg23[%c0_155, %c0_156] : memref<1x1xf32, #tpu.memory_space<vmem>>, vector<1x1xf32>
    %374 = vector.broadcast %373 : vector<1x1xf32> to vector<2x1xf32>
    %375 = arith.addf %372, %374 : vector<2x1xf32>
    %376 = arith.negf %375 : vector<2x1xf32>
    %377 = math.exp %376 : vector<2x1xf32>
    %cst_157 = arith.constant 1.000000e+00 : f32
    %378 = vector.broadcast %cst_157 : f32 to vector<2x1xf32>
    %379 = arith.addf %378, %377 : vector<2x1xf32>
    %380 = arith.divf %378, %379 : vector<2x1xf32>
    %c0_158 = arith.constant 0 : index
    %c0_159 = arith.constant 0 : index
    %381 = vector.load %arg24[%c0_158, %c0_159] : memref<2x1xf32, #tpu.memory_space<vmem>>, vector<2x1xf32>
    tpu.vector_store %arg24[%c0_158, %c0_159], %380 {strides = array<i32>} : memref<2x1xf32, #tpu.memory_space<vmem>>, vector<2x1xf32>,
    return
  }
}

</mosaic_0001>

<llo_original>
// kernel: vanilla_bert_forward.1
$region0: #{vanilla_bert_forward.1}
  #allocation0 [shape = 'u32[]', space=smem, size = 0x4, offset = 0x4, fixed_abs, tag = 'smem constant byte address 0x4 - core index']
  #allocation1 [shape = 'u32[144,128]{1,0:T(1,128)}', space=vmem, size = 0x12000, scoped, tag = 'internal scratch']
  #allocation2 [shape = 'f32[1,1]{1,0:T(1,128)S(1)}', space=vmem, size = 0x200, scoped, tag = 'scoped memory for vanilla_bert_forward.1']
  %s0 = inlined_call_operand.vmem [shape: s32[16,1], index: 0, kind: input, shape index: {}]
  %s1 = inlined_call_operand.vmem [shape: s32[16,1], index: 1, kind: input, shape index: {}]
  %s2 = inlined_call_operand.vmem [shape: s32[2,1,8], index: 2, kind: input, shape index: {}]
  %s3 = inlined_call_operand.vmem [shape: f32[100,32], index: 3, kind: input, shape index: {}]
  %s4 = inlined_call_operand.vmem [shape: f32[16,32], index: 4, kind: input, shape index: {}]
  %s5 = inlined_call_operand.vmem [shape: f32[2,32], index: 5, kind: input, shape index: {}]
  %s6 = inlined_call_operand.vmem [shape: f32[1,32], index: 6, kind: input, shape index: {}]
  %s7 = inlined_call_operand.vmem [shape: f32[1,32], index: 7, kind: input, shape index: {}]
  %s8 = inlined_call_operand.vmem [shape: f32[2,32,96], index: 8, kind: input, shape index: {}]
  %s9 = inlined_call_operand.vmem [shape: f32[2,1,96], index: 9, kind: input, shape index: {}]
  %s10 = inlined_call_operand.vmem [shape: f32[2,32,32], index: 10, kind: input, shape index: {}]
  %s11 = inlined_call_operand.vmem [shape: f32[2,1,32], index: 11, kind: input, shape index: {}]
  %s12 = inlined_call_operand.vmem [shape: f32[2,1,32], index: 12, kind: input, shape index: {}]
  %s13 = inlined_call_operand.vmem [shape: f32[2,1,32], index: 13, kind: input, shape index: {}]
  %s14 = inlined_call_operand.vmem [shape: f32[2,32,64], index: 14, kind: input, shape index: {}]
  %s15 = inlined_call_operand.vmem [shape: f32[2,1,64], index: 15, kind: input, shape index: {}]
  %s16 = inlined_call_operand.vmem [shape: f32[2,64,32], index: 16, kind: input, shape index: {}]
  %s17 = inlined_call_operand.vmem [shape: f32[2,1,32], index: 17, kind: input, shape index: {}]
  %s18 = inlined_call_operand.vmem [shape: f32[2,1,32], index: 18, kind: input, shape index: {}]
  %s19 = inlined_call_operand.vmem [shape: f32[2,1,32], index: 19, kind: input, shape index: {}]
  %s20 = inlined_call_operand.vmem [shape: f32[32,32], index: 20, kind: input, shape index: {}]
  %s21 = inlined_call_operand.vmem [shape: f32[1,32], index: 21, kind: input, shape index: {}]
  %s22 = inlined_call_operand.vmem [shape: f32[32,1], index: 22, kind: input, shape index: {}]
  %s23 = inlined_call_operand.<no memory space> [shape: f32[1,1], index: 23, kind: input, shape index: {}]
  %s24 = inlined_call_operand.vmem [shape: f32[2,1], index: 24, kind: output, shape index: {}]
  %s25 = sld [smem:[#allocation0]]
  $region106: #{vanilla_bert_forward.1} parent=0
    _
  %s27 = ssub.s32 1, %s25
  %s28 = scalar_select 0, %s27, %s25
  %v29 = vstv %s23
  %30 = vst [vmem:[#allocation2] sm:$0x1] %v29
  // Predicated region
  $region2: #{vanilla_bert_forward.1} parent=0 // pred_check
    _
  $region3: #{vanilla_bert_forward.1} parent=0 // pred_check_branch
    %32 = sbr.rel (0) target = $region5
  $region4: #{vanilla_bert_forward.1} parent=0 // pred_region
    _
  $region5: #{vanilla_bert_forward.1} parent=0 // pred_fallthru
    _
  // Predicated region
  $region6: #{vanilla_bert_forward.1} parent=0 // pred_check
    _
  $region7: #{vanilla_bert_forward.1} parent=0 // pred_check_branch
    %34 = sbr.rel (0) target = $region9
  $region8: #{vanilla_bert_forward.1} parent=0 // pred_region
    _
  $region9: #{vanilla_bert_forward.1} parent=0 // pred_fallthru
    _
  // Predicated region
  $region10: #{vanilla_bert_forward.1} parent=0 // pred_check
    _
  $region11: #{vanilla_bert_forward.1} parent=0 // pred_check_branch
    %36 = sbr.rel (0) target = $region13
  $region12: #{vanilla_bert_forward.1} parent=0 // pred_region
    _
  $region13: #{vanilla_bert_forward.1} parent=0 // pred_fallthru
    _
  // Predicated region
  $region14: #{vanilla_bert_forward.1} parent=0 // pred_check
    _
  $region15: #{vanilla_bert_forward.1} parent=0 // pred_check_branch
    %38 = sbr.rel (0) target = $region17
  $region16: #{vanilla_bert_forward.1} parent=0 // pred_region
    _
  $region17: #{vanilla_bert_forward.1} parent=0 // pred_fallthru
    _
  // Predicated region
  $region18: #{vanilla_bert_forward.1} parent=0 // pred_check
    _
  $region19: #{vanilla_bert_forward.1} parent=0 // pred_check_branch
    %40 = sbr.rel (0) target = $region21
  $region20: #{vanilla_bert_forward.1} parent=0 // pred_region
    _
  $region21: #{vanilla_bert_forward.1} parent=0 // pred_fallthru
    _
  // Predicated region
  $region22: #{vanilla_bert_forward.1} parent=0 // pred_check
    _
  $region23: #{vanilla_bert_forward.1} parent=0 // pred_check_branch
    %42 = sbr.rel (0) target = $region25
  $region24: #{vanilla_bert_forward.1} parent=0 // pred_region
    _
  $region25: #{vanilla_bert_forward.1} parent=0 // pred_fallthru
    _
  // Predicated region
  $region26: #{vanilla_bert_forward.1} parent=0 // pred_check
    _
  $region27: #{vanilla_bert_forward.1} parent=0 // pred_check_branch
    %44 = sbr.rel (0) target = $region29
  $region28: #{vanilla_bert_forward.1} parent=0 // pred_region
    _
  $region29: #{vanilla_bert_forward.1} parent=0 // pred_fallthru
    _
  // Predicated region
  $region30: #{vanilla_bert_forward.1} parent=0 // pred_check
    _
  $region31: #{vanilla_bert_forward.1} parent=0 // pred_check_branch
    %46 = sbr.rel (0) target = $region33
  $region32: #{vanilla_bert_forward.1} parent=0 // pred_region
    _
  $region33: #{vanilla_bert_forward.1} parent=0 // pred_fallthru
    _
  // Predicated region
  $region34: #{vanilla_bert_forward.1} parent=0 // pred_check
    _
  $region35: #{vanilla_bert_forward.1} parent=0 // pred_check_branch
    %48 = sbr.rel (0) target = $region37
  $region36: #{vanilla_bert_forward.1} parent=0 // pred_region
    _
  $region37: #{vanilla_bert_forward.1} parent=0 // pred_fallthru
    _
  // Predicated region
  $region38: #{vanilla_bert_forward.1} parent=0 // pred_check
    _
  $region39: #{vanilla_bert_forward.1} parent=0 // pred_check_branch
    %50 = sbr.rel (0) target = $region41
  $region40: #{vanilla_bert_forward.1} parent=0 // pred_region
    _
  $region41: #{vanilla_bert_forward.1} parent=0 // pred_fallthru
    _
  // Predicated region
  $region42: #{vanilla_bert_forward.1} parent=0 // pred_check
    _
  $region43: #{vanilla_bert_forward.1} parent=0 // pred_check_branch
    %52 = sbr.rel (0) target = $region45
  $region44: #{vanilla_bert_forward.1} parent=0 // pred_region
    _
  $region45: #{vanilla_bert_forward.1} parent=0 // pred_fallthru
    _
  // Predicated region
  $region46: #{vanilla_bert_forward.1} parent=0 // pred_check
    _
  $region47: #{vanilla_bert_forward.1} parent=0 // pred_check_branch
    %54 = sbr.rel (0) target = $region49
  $region48: #{vanilla_bert_forward.1} parent=0 // pred_region
    _
  $region49: #{vanilla_bert_forward.1} parent=0 // pred_fallthru
    _
  // Predicated region
  $region50: #{vanilla_bert_forward.1} parent=0 // pred_check
    _
  $region51: #{vanilla_bert_forward.1} parent=0 // pred_check_branch
    %56 = sbr.rel (0) target = $region53
  $region52: #{vanilla_bert_forward.1} parent=0 // pred_region
    _
  $region53: #{vanilla_bert_forward.1} parent=0 // pred_fallthru
    _
  // Predicated region
  $region54: #{vanilla_bert_forward.1} parent=0 // pred_check
    _
  $region55: #{vanilla_bert_forward.1} parent=0 // pred_check_branch
    %58 = sbr.rel (0) target = $region57
  $region56: #{vanilla_bert_forward.1} parent=0 // pred_region
    _
  $region57: #{vanilla_bert_forward.1} parent=0 // pred_fallthru
    _
  // Predicated region
  $region58: #{vanilla_bert_forward.1} parent=0 // pred_check
    _
  $region59: #{vanilla_bert_forward.1} parent=0 // pred_check_branch
    %60 = sbr.rel (0) target = $region61
  $region60: #{vanilla_bert_forward.1} parent=0 // pred_region
    _
  $region61: #{vanilla_bert_forward.1} parent=0 // pred_fallthru
    _
  // Predicated region
  $region62: #{vanilla_bert_forward.1} parent=0 // pred_check
    _
  $region63: #{vanilla_bert_forward.1} parent=0 // pred_check_branch
    %62 = sbr.rel (0) target = $region65
  $region64: #{vanilla_bert_forward.1} parent=0 // pred_region
    _
  $region65: #{vanilla_bert_forward.1} parent=0 // pred_fallthru
    _
  // Predicated region
  $region66: #{vanilla_bert_forward.1} parent=0 // pred_check
    _
  $region67: #{vanilla_bert_forward.1} parent=0 // pred_check_branch
    %64 = sbr.rel (0) target = $region69
  $region68: #{vanilla_bert_forward.1} parent=0 // pred_region
    _
  $region69: #{vanilla_bert_forward.1} parent=0 // pred_fallthru
    _
  // Predicated region
  $region70: #{vanilla_bert_forward.1} parent=0 // pred_check
    _
  $region71: #{vanilla_bert_forward.1} parent=0 // pred_check_branch
    %66 = sbr.rel (0) target = $region73
  $region72: #{vanilla_bert_forward.1} parent=0 // pred_region
    _
  $region73: #{vanilla_bert_forward.1} parent=0 // pred_fallthru
    _
  // Predicated region
  $region74: #{vanilla_bert_forward.1} parent=0 // pred_check
    _
  $region75: #{vanilla_bert_forward.1} parent=0 // pred_check_branch
    %68 = sbr.rel (0) target = $region77
  $region76: #{vanilla_bert_forward.1} parent=0 // pred_region
    _
  $region77: #{vanilla_bert_forward.1} parent=0 // pred_fallthru
    _
  // Predicated region
  $region78: #{vanilla_bert_forward.1} parent=0 // pred_check
    _
  $region79: #{vanilla_bert_forward.1} parent=0 // pred_check_branch
    %70 = sbr.rel (0) target = $region81
  $region80: #{vanilla_bert_forward.1} parent=0 // pred_region
    _
  $region81: #{vanilla_bert_forward.1} parent=0 // pred_fallthru
    _
  // Predicated region
  $region82: #{vanilla_bert_forward.1} parent=0 // pred_check
    _
  $region83: #{vanilla_bert_forward.1} parent=0 // pred_check_branch
    %72 = sbr.rel (0) target = $region85
  $region84: #{vanilla_bert_forward.1} parent=0 // pred_region
    _
  $region85: #{vanilla_bert_forward.1} parent=0 // pred_fallthru
    _
  // Predicated region
  $region86: #{vanilla_bert_forward.1} parent=0 // pred_check
    _
  $region87: #{vanilla_bert_forward.1} parent=0 // pred_check_branch
    %74 = sbr.rel (0) target = $region89
  $region88: #{vanilla_bert_forward.1} parent=0 // pred_region
    _
  $region89: #{vanilla_bert_forward.1} parent=0 // pred_fallthru
    _
  // Predicated region
  $region90: #{vanilla_bert_forward.1} parent=0 // pred_check
    _
  $region91: #{vanilla_bert_forward.1} parent=0 // pred_check_branch
    %76 = sbr.rel (0) target = $region93
  $region92: #{vanilla_bert_forward.1} parent=0 // pred_region
    _
  $region93: #{vanilla_bert_forward.1} parent=0 // pred_fallthru
    _
  // Predicated region
  $region94: #{vanilla_bert_forward.1} parent=0 // pred_check
    _
  $region95: #{vanilla_bert_forward.1} parent=0 // pred_check_branch
    %78 = sbr.rel (0) target = $region97
  $region96: #{vanilla_bert_forward.1} parent=0 // pred_region
    _
  $region97: #{vanilla_bert_forward.1} parent=0 // pred_fallthru
    _
  %v80 = vlaneseq
  %v81 = vand.u32 %v80, 127
  %v82 = vld [vmem:[%s0] sm:$0xff]
  %v83 = vld [vmem:[%s0 + $0x8] sm:$0xff]
  %84 = vset.pattern.permute.xlu0 0
  %85 = vperm.xlu0 %84, %v82
  %v86 = vpop.permute.xlu0 %85
  %87 = vset.pattern.permute.xlu0 0
  %88 = vperm.xlu0 %87, %v83
  %v89 = vpop.permute.xlu0 %88
  %vm90 = vcmp.eq.s32.totalorder %v86, %v81
  %vm91 = vcmp.eq.s32.totalorder %v89, %v81
  %v92 = vsel %vm90, 1, 0
  %v93 = vsel %vm91, 1, 0
  %v94 = vcvt.s32.f32 %v92
  %v95 = vcvt.s32.f32 %v93
  %v96 = vld [vmem:[%s1] sm:$0xff]
  %v97 = vld [vmem:[%s1 + $0x8] sm:$0xff]
  %98 = vset.pattern.permute.xlu0 0
  %99 = vperm.xlu0 %98, %v96
  %v100 = vpop.permute.xlu0 %99
  %101 = vset.pattern.permute.xlu0 0
  %102 = vperm.xlu0 %101, %v97
  %v103 = vpop.permute.xlu0 %102
  %vm104 = vcmp.eq.s32.totalorder %v100, %v81
  %vm105 = vcmp.eq.s32.totalorder %v103, %v81
  %v106 = vsel %vm104, 1, 0
  %v107 = vsel %vm105, 1, 0
  %v108 = vcvt.s32.f32 %v106
  %v109 = vcvt.s32.f32 %v107
  %v110 = vld [vmem:[%s3] sm:$0xff]
  %v111 = vld [vmem:[%s3 + $0x8] sm:$0xff]
  %v112 = vld [vmem:[%s3 + $0x10] sm:$0xff]
  %v113 = vld [vmem:[%s3 + $0x18] sm:$0xff]
  %v114 = vld [vmem:[%s3 + $0x20] sm:$0xff]
  %v115 = vld [vmem:[%s3 + $0x28] sm:$0xff]
  %v116 = vld [vmem:[%s3 + $0x30] sm:$0xff]
  %v117 = vld [vmem:[%s3 + $0x38] sm:$0xff]
  %v118 = vld [vmem:[%s3 + $0x40] sm:$0xff]
  %v119 = vld [vmem:[%s3 + $0x48] sm:$0xff]
  %v120 = vld [vmem:[%s3 + $0x50] sm:$0xff]
  %v121 = vld [vmem:[%s3 + $0x58] sm:$0xff]
  %v122 = vld [vmem:[%s3 + $0x60] sm:$0xf]
  %v123 = vld [vmem:[%s4] sm:$0xff]
  %v124 = vld [vmem:[%s4 + $0x8] sm:$0xff]
  %vm125 = vcmask 130048
  %v127 = vsel %vm125, %v108, 0
  %v130 = vsel %vm125, %v109, 0
  %132 = vmatprep.subr.mxu0 0.0
  %133 = vmatpush1.msra.mxu0 %v123
  %134 = vmatprep.subr.mxu0 0.0
  %135 = vmatpush1.msra.mxu0 %v124
  %136 = vmatprep.subr.mxu0 0.0
  %137 = vmatpush1.msra.mxu0 0.0
  %138 = vmatprep.subr.mxu0 0.0
  %139 = vmatpush1.msra.mxu0 0.0
  %140 = vmatprep.subr.mxu0 0.0
  %141 = vmatpush1.msra.mxu0 0.0
  %142 = vmatprep.subr.mxu0 0.0
  %143 = vmatpush1.msra.mxu0 0.0
  %144 = vmatprep.subr.mxu0 0.0
  %145 = vmatpush1.msra.mxu0 0.0
  %146 = vmatprep.subr.mxu0 0.0
  %147 = vmatpush1.msra.mxu0 0.0
  %148 = vmatprep.subr.mxu0 0.0
  %149 = vmatpush1.msra.mxu0 0.0
  %150 = vmatprep.subr.mxu0 0.0
  %151 = vmatpush1.msra.mxu0 0.0
  %152 = vmatprep.subr.mxu0 0.0
  %153 = vmatpush1.msra.mxu0 0.0
  %154 = vmatprep.subr.mxu0 0.0
  %155 = vmatpush1.msra.mxu0 0.0
  %156 = vmatprep.subr.mxu0 0.0
  %157 = vmatpush1.msra.mxu0 0.0
  %158 = vmatprep.subr.mxu0 0.0
  %159 = vmatpush1.msra.mxu0 0.0
  %160 = vmatprep.subr.mxu0 0.0
  %161 = vmatpush1.msra.mxu0 0.0
  %162 = vmatprep.subr.mxu0 0.0
  %163 = vmatpush1.msra.mxu0 0.0
  %164 = vmatprep.subr.mxu0 0.0
  %165 = vmatpush1.msra.mxu0 0.0
  %166 = vmatprep.subr.mxu0 0.0
  %167 = vmatpush1.msra.mxu0 0.0
  %168 = vmatprep.subr.mxu0 0.0
  %169 = vmatpush1.msra.mxu0 0.0
  %170 = vmatprep.subr.mxu0 0.0
  %171 = vmatpush1.msra.mxu0 0.0
  %172 = vmatprep.subr.mxu0 0.0
  %173 = vmatpush1.msra.mxu0 0.0
  %174 = vmatprep.subr.mxu0 0.0
  %175 = vmatpush1.msra.mxu0 0.0
  %176 = vmatprep.subr.mxu0 0.0
  %177 = vmatpush1.msra.mxu0 0.0
  %178 = vmatprep.subr.mxu0 0.0
  %179 = vmatpush1.msra.mxu0 0.0
  %180 = vmatprep.subr.mxu0 0.0
  %181 = vmatpush1.msra.mxu0 0.0
  %182 = vmatprep.subr.mxu0 0.0
  %183 = vmatpush1.msra.mxu0 0.0
  %184 = vmatprep.subr.mxu0 0.0
  %185 = vmatpush1.msra.mxu0 0.0
  %186 = vmatprep.subr.mxu0 0.0
  %187 = vmatpush1.msra.mxu0 0.0
  %188 = vmatprep.subr.mxu0 0.0
  %189 = vmatpush1.msra.mxu0 0.0
  %190 = vmatprep.subr.mxu0 0.0
  %191 = vmatpush1.msra.mxu0 0.0
  %192 = vmatprep.subr.mxu0 0.0
  %193 = vmatpush1.msra.mxu0 0.0
  %194 = vmatprep.subr.mxu0 0.0
  %195 = vmatpush1.msra.mxu0 0.0
  %196 = vmatprep.mubr.f32.mxu0 0.0
  %197 = vmatmul.mubr.f32.gmra.mrb[0].mxu0 %v127
  %v198 = vpop.f32.mrb[0].mxu0
  %v199 = vadd.f32 0.0, %v198
  %v200 = vpop.f32.mrb[0].mxu0
  %201 = vmatprep.mubr.f32.mxu0 0.0
  %202 = vmatmul.mubr.f32.gmra.mrb[0].mxu0 %v130
  %v203 = vpop.f32.mrb[0].mxu0
  %v204 = vadd.f32 0.0, %v203
  %v205 = vpop.f32.mrb[0].mxu0
  %206 = vdwg.mxu0
  %vm207 = vcmask 818176
  %v209 = vsel %vm207, %v94, 0
  %v212 = vsel %vm207, %v95, 0
  %vm214 = vcmask 1043456
  %v216 = vsel %vm214, %v122, 0
  %218 = vmatprep.subr.mxu0 0.0
  %219 = vmatpush1.msra.mxu0 %v110
  %220 = vmatprep.subr.mxu0 0.0
  %221 = vmatpush1.msra.mxu0 %v111
  %222 = vmatprep.subr.mxu0 0.0
  %223 = vmatpush1.msra.mxu0 %v112
  %224 = vmatprep.subr.mxu0 0.0
  %225 = vmatpush1.msra.mxu0 %v113
  %226 = vmatprep.subr.mxu0 0.0
  %227 = vmatpush1.msra.mxu0 %v114
  %228 = vmatprep.subr.mxu0 0.0
  %229 = vmatpush1.msra.mxu0 %v115
  %230 = vmatprep.subr.mxu0 0.0
  %231 = vmatpush1.msra.mxu0 %v116
  %232 = vmatprep.subr.mxu0 0.0
  %233 = vmatpush1.msra.mxu0 %v117
  %234 = vmatprep.subr.mxu0 0.0
  %235 = vmatpush1.msra.mxu0 %v118
  %236 = vmatprep.subr.mxu0 0.0
  %237 = vmatpush1.msra.mxu0 %v119
  %238 = vmatprep.subr.mxu0 0.0
  %239 = vmatpush1.msra.mxu0 %v120
  %240 = vmatprep.subr.mxu0 0.0
  %241 = vmatpush1.msra.mxu0 %v121
  %242 = vmatprep.subr.mxu0 0.0
  %243 = vmatpush1.msra.mxu0 %v216
  %244 = vmatprep.subr.mxu0 0.0
  %245 = vmatpush1.msra.mxu0 0.0
  %246 = vmatprep.subr.mxu0 0.0
  %247 = vmatpush1.msra.mxu0 0.0
  %248 = vmatprep.subr.mxu0 0.0
  %249 = vmatpush1.msra.mxu0 0.0
  %250 = vmatprep.subr.mxu0 0.0
  %251 = vmatpush1.msra.mxu0 0.0
  %252 = vmatprep.subr.mxu0 0.0
  %253 = vmatpush1.msra.mxu0 0.0
  %254 = vmatprep.subr.mxu0 0.0
  %255 = vmatpush1.msra.mxu0 0.0
  %256 = vmatprep.subr.mxu0 0.0
  %257 = vmatpush1.msra.mxu0 0.0
  %258 = vmatprep.subr.mxu0 0.0
  %259 = vmatpush1.msra.mxu0 0.0
  %260 = vmatprep.subr.mxu0 0.0
  %261 = vmatpush1.msra.mxu0 0.0
  %262 = vmatprep.subr.mxu0 0.0
  %263 = vmatpush1.msra.mxu0 0.0
  %264 = vmatprep.subr.mxu0 0.0
  %265 = vmatpush1.msra.mxu0 0.0
  %266 = vmatprep.subr.mxu0 0.0
  %267 = vmatpush1.msra.mxu0 0.0
  %268 = vmatprep.subr.mxu0 0.0
  %269 = vmatpush1.msra.mxu0 0.0
  %270 = vmatprep.subr.mxu0 0.0
  %271 = vmatpush1.msra.mxu0 0.0
  %272 = vmatprep.subr.mxu0 0.0
  %273 = vmatpush1.msra.mxu0 0.0
  %274 = vmatprep.subr.mxu0 0.0
  %275 = vmatpush1.msra.mxu0 0.0
  %276 = vmatprep.subr.mxu0 0.0
  %277 = vmatpush1.msra.mxu0 0.0
  %278 = vmatprep.subr.mxu0 0.0
  %279 = vmatpush1.msra.mxu0 0.0
  %280 = vmatprep.subr.mxu0 0.0
  %281 = vmatpush1.msra.mxu0 0.0
  %282 = vmatprep.mubr.f32.mxu0 0.0
  %283 = vmatmul.mubr.f32.gmra.mrb[0].mxu0 %v209
  %v284 = vpop.f32.mrb[0].mxu0
  %v285 = vadd.f32 %v199, %v284
  %v286 = vpop.f32.mrb[0].mxu0
  %287 = vmatprep.mubr.f32.mxu0 0.0
  %288 = vmatmul.mubr.f32.gmra.mrb[0].mxu0 %v212
  %v289 = vpop.f32.mrb[0].mxu0
  %v290 = vadd.f32 %v204, %v289
  %v291 = vpop.f32.mrb[0].mxu0
  %292 = vdwg.mxu0
  %v293 = vld [vmem:[%s5] sm:$0x1]
  %v294 = vlaneseq
  %v295 = vshrl.u32 %v294, 7
  %v296 = vsub.s32 0, %v295
  %v297 = vrot.slane %v293, %v296
  %v298 = vadd.f32 %v285, %v297
  %v299 = vadd.f32 %v290, %v297
  %v300 = vld [vmem:[%s6] sm:$0x1]
  %v301 = vld [vmem:[%s7] sm:$0x1]
  %vm302 = vcmask 261120
  %v303 = vsel %vm302, %v298, 0.0
  %304 = vadd.xlane.f32.xlu0 %v303
  %v305 = vpop.xlane.xlu0 %304
  %v306 = vsel %vm302, %v299, 0.0
  %307 = vadd.xlane.f32.xlu0 %v306
  %v308 = vpop.xlane.xlu0 %307
  %v309 = vrcp.pop 32.0
  %v310 = vmul.f32 %v305, %v309
  %v311 = vmul.f32 %v308, %v309
  %v312 = vmul.f32 %v298, %v298
  %v313 = vmul.f32 %v299, %v299
  %v314 = vsel %vm302, %v312, 0.0
  %315 = vadd.xlane.f32.xlu0 %v314
  %v316 = vpop.xlane.xlu0 %315
  %v317 = vsel %vm302, %v313, 0.0
  %318 = vadd.xlane.f32.xlu0 %v317
  %v319 = vpop.xlane.xlu0 %318
  %v320 = vmul.f32 %v316, %v309
  %v321 = vmul.f32 %v319, %v309
  %v322 = vmul.f32 %v310, %v310
  %v323 = vmul.f32 %v311, %v311
  %v324 = vsub.f32 %v320, %v322
  %v325 = vsub.f32 %v321, %v323
  %v326 = vsub.f32 %v298, %v310
  %v327 = vsub.f32 %v299, %v311
  %v328 = vadd.f32 %v324, 1e-12
  %v329 = vadd.f32 %v325, 1e-12
  %v330 = vrsqrt.pop %v328
  %v331 = vrsqrt.pop %v329
  %v332 = vmul.f32 %v326, %v330
  %v333 = vmul.f32 %v327, %v331
  %v335 = vlaneseq
  %v336 = vshrl.u32 %v335, 7
  %v337 = vsub.s32 0, %v336
  %v338 = vrot.slane %v300, %v337
  %v340 = vmul.f32 %v332, %v338
  %v341 = vmul.f32 %v333, %v338
  %v343 = vlaneseq
  %v344 = vshrl.u32 %v343, 7
  %v345 = vsub.s32 0, %v344
  %v346 = vrot.slane %v301, %v345
  %v348 = vadd.f32 %v340, %v346
  %v349 = vadd.f32 %v341, %v346
  %v350 = vld [vmem:[%s2] sm:$0x1]
  %v351 = vld [vmem:[%s2 + $0x1] sm:$0x1]
  %v352 = vcvt.s32.f32 %v350
  %v353 = vcvt.s32.f32 %v351
  %v354 = vsub.f32 1.0, %v352
  %v355 = vsub.f32 1.0, %v353
  %v356 = vmul.f32 %v354, -1e+09
  %v357 = vmul.f32 %v355, -1e+09
  %v358 = vld [vmem:[%s8] sm:$0xff]
  %v359 = vld [vmem:[%s8 + $0x8] sm:$0xff]
  %v360 = vld [vmem:[%s8 + $0x10] sm:$0xff]
  %v361 = vld [vmem:[%s8 + $0x18] sm:$0xff]
  %v362 = vpack.c.bf16 %v349, %v348
  %v363 = vpack.c.bf16 %v359, %v358
  %v364 = vpack.c.bf16 %v361, %v360
  %v365 = vld [vmem:[%s9] sm:$0x1]
  %v367 = vlaneseq
  %v368 = vshrl.u32 %v367, 7
  %v369 = vsub.s32 0, %v368
  %v370 = vrot.slane %v365, %v369
  %v373 = vsel %vm302, %v362, 0
  %375 = vmatprep.subr.bf16.mxu0 0
  %376 = vmatpush1.bf16.msra.mxu0 %v363
  %377 = vmatprep.subr.bf16.mxu0 0
  %378 = vmatpush1.bf16.msra.mxu0 %v364
  %379 = vmatprep.subr.bf16.mxu0 0
  %380 = vmatpush1.bf16.msra.mxu0 0
  %381 = vmatprep.subr.bf16.mxu0 0
  %382 = vmatpush1.bf16.msra.mxu0 0
  %383 = vmatprep.subr.bf16.mxu0 0
  %384 = vmatpush1.bf16.msra.mxu0 0
  %385 = vmatprep.subr.bf16.mxu0 0
  %386 = vmatpush1.bf16.msra.mxu0 0
  %387 = vmatprep.subr.bf16.mxu0 0
  %388 = vmatpush1.bf16.msra.mxu0 0
  %389 = vmatprep.subr.bf16.mxu0 0
  %390 = vmatpush1.bf16.msra.mxu0 0
  %391 = vmatprep.subr.bf16.mxu0 0
  %392 = vmatpush1.bf16.msra.mxu0 0
  %393 = vmatprep.subr.bf16.mxu0 0
  %394 = vmatpush1.bf16.msra.mxu0 0
  %395 = vmatprep.subr.bf16.mxu0 0
  %396 = vmatpush1.bf16.msra.mxu0 0
  %397 = vmatprep.subr.bf16.mxu0 0
  %398 = vmatpush1.bf16.msra.mxu0 0
  %399 = vmatprep.subr.bf16.mxu0 0
  %400 = vmatpush1.bf16.msra.mxu0 0
  %401 = vmatprep.subr.bf16.mxu0 0
  %402 = vmatpush1.bf16.msra.mxu0 0
  %403 = vmatprep.subr.bf16.mxu0 0
  %404 = vmatpush1.bf16.msra.mxu0 0
  %405 = vmatprep.subr.bf16.mxu0 0
  %406 = vmatpush1.bf16.msra.mxu0 0
  %407 = vmatprep.mubr.bf16.mxu0 0
  %408 = vmatmul.mubr.bf16.gmra.mrb[0].mxu0 %v373
  %v409 = vpop.f32.mrb[0].mxu0
  %v410 = vadd.f32 %v370, %v409
  %v411 = vpop.f32.mrb[0].mxu0
  %v412 = vpop.f32.mrb[0].mxu0
  %v413 = vadd.f32 %v370, %v412
  %v414 = vpop.f32.mrb[0].mxu0
  %415 = vdwg.mxu0
  %v416 = vpack.c.bf16 %v410, %v410
  %v417 = vpack.c.bf16 %v413, %v413
  %v420 = vlaneseq
  %v421 = vshrl.u32 %v420, 7
  %v422 = vsub.s32 0, %v421
  %v423 = vrot.slane %v356, %v422
  %v424 = vlaneseq
  %v425 = vshrl.u32 %v424, 7
  %v426 = vsub.s32 0, %v425
  %v427 = vrot.slane %v357, %v426
  %431 = vrot.lane.b32.xlu0 %v416, 96
  %v432 = vpop.permute.xlu0 %431
  %v434 = vsel %vm125, %v416, 0
  %v437 = vsel %vm125, %v432, 0
  %439 = vmatprep.subr.bf16.mxu0 0
  %440 = vmatpush1.bf16.xpose.msra.mxu0 %v437
  %441 = vmatprep.subr.bf16.mxu0 0
  %442 = vmatpush1.bf16.xpose.msra.mxu0 0
  %443 = vmatprep.subr.bf16.mxu0 0
  %444 = vmatpush1.bf16.xpose.msra.mxu0 0
  %445 = vmatprep.subr.bf16.mxu0 0
  %446 = vmatpush1.bf16.xpose.msra.mxu0 0
  %447 = vmatprep.subr.bf16.mxu0 0
  %448 = vmatpush1.bf16.xpose.msra.mxu0 0
  %449 = vmatprep.subr.bf16.mxu0 0
  %450 = vmatpush1.bf16.xpose.msra.mxu0 0
  %451 = vmatprep.subr.bf16.mxu0 0
  %452 = vmatpush1.bf16.xpose.msra.mxu0 0
  %453 = vmatprep.subr.bf16.mxu0 0
  %454 = vmatpush1.bf16.xpose.msra.mxu0 0
  %455 = vmatprep.subr.bf16.mxu0 0
  %456 = vmatpush1.bf16.xpose.msra.mxu0 0
  %457 = vmatprep.subr.bf16.mxu0 0
  %458 = vmatpush1.bf16.xpose.msra.mxu0 0
  %459 = vmatprep.subr.bf16.mxu0 0
  %460 = vmatpush1.bf16.xpose.msra.mxu0 0
  %461 = vmatprep.subr.bf16.mxu0 0
  %462 = vmatpush1.bf16.xpose.msra.mxu0 0
  %463 = vmatprep.subr.bf16.mxu0 0
  %464 = vmatpush1.bf16.xpose.msra.mxu0 0
  %465 = vmatprep.subr.bf16.mxu0 0
  %466 = vmatpush1.bf16.xpose.msra.mxu0 0
  %467 = vmatprep.subr.bf16.mxu0 0
  %468 = vmatpush1.bf16.xpose.msra.mxu0 0
  %469 = vmatprep.subr.bf16.mxu0 0
  %470 = vmatpush1.bf16.xpose.msra.mxu0 0
  %471 = vmatprep.mubr.bf16.mxu0 0
  %472 = vmatmul.mubr.bf16.gmra.mrb[0].mxu0 %v434
  %v473 = vpop.f32.mrb[0].mxu0
  %v474 = vadd.f32 %v423, %v473
  %v475 = vpop.f32.mrb[0].mxu0
  %v476 = vpop.f32.mrb[0].mxu0
  %v477 = vpop.f32.mrb[0].mxu0
  %478 = vdwg.mxu0
  %480 = vrot.lane.b32.xlu0 %v417, 96
  %v481 = vpop.permute.xlu0 %480
  %v483 = vsel %vm125, %v417, 0
  %v486 = vsel %vm125, %v481, 0
  %488 = vmatprep.subr.bf16.mxu0 0
  %489 = vmatpush1.bf16.xpose.msra.mxu0 %v486
  %490 = vmatprep.subr.bf16.mxu0 0
  %491 = vmatpush1.bf16.xpose.msra.mxu0 0
  %492 = vmatprep.subr.bf16.mxu0 0
  %493 = vmatpush1.bf16.xpose.msra.mxu0 0
  %494 = vmatprep.subr.bf16.mxu0 0
  %495 = vmatpush1.bf16.xpose.msra.mxu0 0
  %496 = vmatprep.subr.bf16.mxu0 0
  %497 = vmatpush1.bf16.xpose.msra.mxu0 0
  %498 = vmatprep.subr.bf16.mxu0 0
  %499 = vmatpush1.bf16.xpose.msra.mxu0 0
  %500 = vmatprep.subr.bf16.mxu0 0
  %501 = vmatpush1.bf16.xpose.msra.mxu0 0
  %502 = vmatprep.subr.bf16.mxu0 0
  %503 = vmatpush1.bf16.xpose.msra.mxu0 0
  %504 = vmatprep.subr.bf16.mxu0 0
  %505 = vmatpush1.bf16.xpose.msra.mxu0 0
  %506 = vmatprep.subr.bf16.mxu0 0
  %507 = vmatpush1.bf16.xpose.msra.mxu0 0
  %508 = vmatprep.subr.bf16.mxu0 0
  %509 = vmatpush1.bf16.xpose.msra.mxu0 0
  %510 = vmatprep.subr.bf16.mxu0 0
  %511 = vmatpush1.bf16.xpose.msra.mxu0 0
  %512 = vmatprep.subr.bf16.mxu0 0
  %513 = vmatpush1.bf16.xpose.msra.mxu0 0
  %514 = vmatprep.subr.bf16.mxu0 0
  %515 = vmatpush1.bf16.xpose.msra.mxu0 0
  %516 = vmatprep.subr.bf16.mxu0 0
  %517 = vmatpush1.bf16.xpose.msra.mxu0 0
  %518 = vmatprep.subr.bf16.mxu0 0
  %519 = vmatpush1.bf16.xpose.msra.mxu0 0
  %520 = vmatprep.mubr.bf16.mxu0 0
  %521 = vmatmul.mubr.bf16.gmra.mrb[0].mxu0 %v483
  %v522 = vpop.f32.mrb[0].mxu0
  %v523 = vadd.f32 %v427, %v522
  %v524 = vpop.f32.mrb[0].mxu0
  %v525 = vpop.f32.mrb[0].mxu0
  %v526 = vpop.f32.mrb[0].mxu0
  %527 = vdwg.mxu0
  %vm528 = vcmask 64512
  %v529 = vsel %vm528, %v474, -inf
  %530 = vmax.xlane.f32.xlu0 %v529
  %v531 = vpop.xlane.xlu0 %530
  %v532 = vsel %vm528, %v523, -inf
  %533 = vmax.xlane.f32.xlu0 %v532
  %v534 = vpop.xlane.xlu0 %533
  %v535 = vsub.f32 %v474, %v531
  %v536 = vsub.f32 %v523, %v534
  %v537 = vmul.f32 %v535, 1.442695
  %v538 = vpow.pop %v537
  %v539 = vmul.f32 %v536, 1.442695
  %v540 = vpow.pop %v539
  %v541 = vsel %vm528, %v538, 0.0
  %542 = vadd.xlane.f32.xlu0 %v541
  %v543 = vpop.xlane.xlu0 %542
  %v544 = vsel %vm528, %v540, 0.0
  %545 = vadd.xlane.f32.xlu0 %v544
  %v546 = vpop.xlane.xlu0 %545
  %v547 = vrcp.pop %v543
  %v548 = vrcp.pop %v546
  %v549 = vmul.f32 %v538, %v547
  %v550 = vmul.f32 %v540, %v548
  %v551 = vpack.c.bf16 %v549, %v549
  %v552 = vpack.c.bf16 %v550, %v550
  %553 = vrot.lane.b32.xlu0 %v416, 64
  %v554 = vpop.permute.xlu0 %553
  %v556 = vsel %vm528, %v551, 0
  %v559 = vsel %vm214, %v554, 0
  %561 = vmatprep.subr.bf16.mxu0 0
  %562 = vmatpush1.bf16.msra.mxu0 %v559
  %563 = vmatprep.subr.bf16.mxu0 0
  %564 = vmatpush1.bf16.msra.mxu0 0
  %565 = vmatprep.subr.bf16.mxu0 0
  %566 = vmatpush1.bf16.msra.mxu0 0
  %567 = vmatprep.subr.bf16.mxu0 0
  %568 = vmatpush1.bf16.msra.mxu0 0
  %569 = vmatprep.subr.bf16.mxu0 0
  %570 = vmatpush1.bf16.msra.mxu0 0
  %571 = vmatprep.subr.bf16.mxu0 0
  %572 = vmatpush1.bf16.msra.mxu0 0
  %573 = vmatprep.subr.bf16.mxu0 0
  %574 = vmatpush1.bf16.msra.mxu0 0
  %575 = vmatprep.subr.bf16.mxu0 0
  %576 = vmatpush1.bf16.msra.mxu0 0
  %577 = vmatprep.subr.bf16.mxu0 0
  %578 = vmatpush1.bf16.msra.mxu0 0
  %579 = vmatprep.subr.bf16.mxu0 0
  %580 = vmatpush1.bf16.msra.mxu0 0
  %581 = vmatprep.subr.bf16.mxu0 0
  %582 = vmatpush1.bf16.msra.mxu0 0
  %583 = vmatprep.subr.bf16.mxu0 0
  %584 = vmatpush1.bf16.msra.mxu0 0
  %585 = vmatprep.subr.bf16.mxu0 0
  %586 = vmatpush1.bf16.msra.mxu0 0
  %587 = vmatprep.subr.bf16.mxu0 0
  %588 = vmatpush1.bf16.msra.mxu0 0
  %589 = vmatprep.subr.bf16.mxu0 0
  %590 = vmatpush1.bf16.msra.mxu0 0
  %591 = vmatprep.subr.bf16.mxu0 0
  %592 = vmatpush1.bf16.msra.mxu0 0
  %593 = vmatprep.mubr.bf16.mxu0 0
  %594 = vmatmul.mubr.bf16.gmra.mrb[0].mxu0 %v556
  %v595 = vpop.f32.mrb[0].mxu0
  %v596 = vadd.f32 0.0, %v595
  %v597 = vpop.f32.mrb[0].mxu0
  %v598 = vpop.f32.mrb[0].mxu0
  %v599 = vpop.f32.mrb[0].mxu0
  %600 = vdwg.mxu0
  %601 = vrot.lane.b32.xlu0 %v417, 64
  %v602 = vpop.permute.xlu0 %601
  %v604 = vsel %vm528, %v552, 0
  %v607 = vsel %vm214, %v602, 0
  %609 = vmatprep.subr.bf16.mxu0 0
  %610 = vmatpush1.bf16.msra.mxu0 %v607
  %611 = vmatprep.subr.bf16.mxu0 0
  %612 = vmatpush1.bf16.msra.mxu0 0
  %613 = vmatprep.subr.bf16.mxu0 0
  %614 = vmatpush1.bf16.msra.mxu0 0
  %615 = vmatprep.subr.bf16.mxu0 0
  %616 = vmatpush1.bf16.msra.mxu0 0
  %617 = vmatprep.subr.bf16.mxu0 0
  %618 = vmatpush1.bf16.msra.mxu0 0
  %619 = vmatprep.subr.bf16.mxu0 0
  %620 = vmatpush1.bf16.msra.mxu0 0
  %621 = vmatprep.subr.bf16.mxu0 0
  %622 = vmatpush1.bf16.msra.mxu0 0
  %623 = vmatprep.subr.bf16.mxu0 0
  %624 = vmatpush1.bf16.msra.mxu0 0
  %625 = vmatprep.subr.bf16.mxu0 0
  %626 = vmatpush1.bf16.msra.mxu0 0
  %627 = vmatprep.subr.bf16.mxu0 0
  %628 = vmatpush1.bf16.msra.mxu0 0
  %629 = vmatprep.subr.bf16.mxu0 0
  %630 = vmatpush1.bf16.msra.mxu0 0
  %631 = vmatprep.subr.bf16.mxu0 0
  %632 = vmatpush1.bf16.msra.mxu0 0
  %633 = vmatprep.subr.bf16.mxu0 0
  %634 = vmatpush1.bf16.msra.mxu0 0
  %635 = vmatprep.subr.bf16.mxu0 0
  %636 = vmatpush1.bf16.msra.mxu0 0
  %637 = vmatprep.subr.bf16.mxu0 0
  %638 = vmatpush1.bf16.msra.mxu0 0
  %639 = vmatprep.subr.bf16.mxu0 0
  %640 = vmatpush1.bf16.msra.mxu0 0
  %641 = vmatprep.mubr.bf16.mxu0 0
  %642 = vmatmul.mubr.bf16.gmra.mrb[0].mxu0 %v604
  %v643 = vpop.f32.mrb[0].mxu0
  %v644 = vadd.f32 0.0, %v643
  %v645 = vpop.f32.mrb[0].mxu0
  %v646 = vpop.f32.mrb[0].mxu0
  %v647 = vpop.f32.mrb[0].mxu0
  %648 = vdwg.mxu0
  %649 = vrot.lane.b32.xlu0 %v416, 112
  %v650 = vpop.permute.xlu0 %649
  %651 = vrot.lane.b32.xlu0 %v416, 80
  %v652 = vpop.permute.xlu0 %651
  %v654 = vsel %vm125, %v650, 0
  %v657 = vsel %vm125, %v652, 0
  %659 = vmatprep.subr.bf16.mxu0 0
  %660 = vmatpush1.bf16.xpose.msra.mxu0 %v657
  %661 = vmatprep.subr.bf16.mxu0 0
  %662 = vmatpush1.bf16.xpose.msra.mxu0 0
  %663 = vmatprep.subr.bf16.mxu0 0
  %664 = vmatpush1.bf16.xpose.msra.mxu0 0
  %665 = vmatprep.subr.bf16.mxu0 0
  %666 = vmatpush1.bf16.xpose.msra.mxu0 0
  %667 = vmatprep.subr.bf16.mxu0 0
  %668 = vmatpush1.bf16.xpose.msra.mxu0 0
  %669 = vmatprep.subr.bf16.mxu0 0
  %670 = vmatpush1.bf16.xpose.msra.mxu0 0
  %671 = vmatprep.subr.bf16.mxu0 0
  %672 = vmatpush1.bf16.xpose.msra.mxu0 0
  %673 = vmatprep.subr.bf16.mxu0 0
  %674 = vmatpush1.bf16.xpose.msra.mxu0 0
  %675 = vmatprep.subr.bf16.mxu0 0
  %676 = vmatpush1.bf16.xpose.msra.mxu0 0
  %677 = vmatprep.subr.bf16.mxu0 0
  %678 = vmatpush1.bf16.xpose.msra.mxu0 0
  %679 = vmatprep.subr.bf16.mxu0 0
  %680 = vmatpush1.bf16.xpose.msra.mxu0 0
  %681 = vmatprep.subr.bf16.mxu0 0
  %682 = vmatpush1.bf16.xpose.msra.mxu0 0
  %683 = vmatprep.subr.bf16.mxu0 0
  %684 = vmatpush1.bf16.xpose.msra.mxu0 0
  %685 = vmatprep.subr.bf16.mxu0 0
  %686 = vmatpush1.bf16.xpose.msra.mxu0 0
  %687 = vmatprep.subr.bf16.mxu0 0
  %688 = vmatpush1.bf16.xpose.msra.mxu0 0
  %689 = vmatprep.subr.bf16.mxu0 0
  %690 = vmatpush1.bf16.xpose.msra.mxu0 0
  %691 = vmatprep.mubr.bf16.mxu0 0
  %692 = vmatmul.mubr.bf16.gmra.mrb[0].mxu0 %v654
  %v693 = vpop.f32.mrb[0].mxu0
  %v694 = vadd.f32 %v423, %v693
  %v695 = vpop.f32.mrb[0].mxu0
  %v696 = vpop.f32.mrb[0].mxu0
  %v697 = vpop.f32.mrb[0].mxu0
  %698 = vdwg.mxu0
  %699 = vrot.lane.b32.xlu0 %v417, 112
  %v700 = vpop.permute.xlu0 %699
  %701 = vrot.lane.b32.xlu0 %v417, 80
  %v702 = vpop.permute.xlu0 %701
  %v704 = vsel %vm125, %v700, 0
  %v707 = vsel %vm125, %v702, 0
  %709 = vmatprep.subr.bf16.mxu0 0
  %710 = vmatpush1.bf16.xpose.msra.mxu0 %v707
  %711 = vmatprep.subr.bf16.mxu0 0
  %712 = vmatpush1.bf16.xpose.msra.mxu0 0
  %713 = vmatprep.subr.bf16.mxu0 0
  %714 = vmatpush1.bf16.xpose.msra.mxu0 0
  %715 = vmatprep.subr.bf16.mxu0 0
  %716 = vmatpush1.bf16.xpose.msra.mxu0 0
  %717 = vmatprep.subr.bf16.mxu0 0
  %718 = vmatpush1.bf16.xpose.msra.mxu0 0
  %719 = vmatprep.subr.bf16.mxu0 0
  %720 = vmatpush1.bf16.xpose.msra.mxu0 0
  %721 = vmatprep.subr.bf16.mxu0 0
  %722 = vmatpush1.bf16.xpose.msra.mxu0 0
  %723 = vmatprep.subr.bf16.mxu0 0
  %724 = vmatpush1.bf16.xpose.msra.mxu0 0
  %725 = vmatprep.subr.bf16.mxu0 0
  %726 = vmatpush1.bf16.xpose.msra.mxu0 0
  %727 = vmatprep.subr.bf16.mxu0 0
  %728 = vmatpush1.bf16.xpose.msra.mxu0 0
  %729 = vmatprep.subr.bf16.mxu0 0
  %730 = vmatpush1.bf16.xpose.msra.mxu0 0
  %731 = vmatprep.subr.bf16.mxu0 0
  %732 = vmatpush1.bf16.xpose.msra.mxu0 0
  %733 = vmatprep.subr.bf16.mxu0 0
  %734 = vmatpush1.bf16.xpose.msra.mxu0 0
  %735 = vmatprep.subr.bf16.mxu0 0
  %736 = vmatpush1.bf16.xpose.msra.mxu0 0
  %737 = vmatprep.subr.bf16.mxu0 0
  %738 = vmatpush1.bf16.xpose.msra.mxu0 0
  %739 = vmatprep.subr.bf16.mxu0 0
  %740 = vmatpush1.bf16.xpose.msra.mxu0 0
  %741 = vmatprep.mubr.bf16.mxu0 0
  %742 = vmatmul.mubr.bf16.gmra.mrb[0].mxu0 %v704
  %v743 = vpop.f32.mrb[0].mxu0
  %v744 = vadd.f32 %v427, %v743
  %v745 = vpop.f32.mrb[0].mxu0
  %v746 = vpop.f32.mrb[0].mxu0
  %v747 = vpop.f32.mrb[0].mxu0
  %748 = vdwg.mxu0
  %v749 = vsel %vm528, %v694, -inf
  %750 = vmax.xlane.f32.xlu0 %v749
  %v751 = vpop.xlane.xlu0 %750
  %v752 = vsel %vm528, %v744, -inf
  %753 = vmax.xlane.f32.xlu0 %v752
  %v754 = vpop.xlane.xlu0 %753
  %v755 = vsub.f32 %v694, %v751
  %v756 = vsub.f32 %v744, %v754
  %v757 = vmul.f32 %v755, 1.442695
  %v758 = vpow.pop %v757
  %v759 = vmul.f32 %v756, 1.442695
  %v760 = vpow.pop %v759
  %v761 = vsel %vm528, %v758, 0.0
  %762 = vadd.xlane.f32.xlu0 %v761
  %v763 = vpop.xlane.xlu0 %762
  %v764 = vsel %vm528, %v760, 0.0
  %765 = vadd.xlane.f32.xlu0 %v764
  %v766 = vpop.xlane.xlu0 %765
  %v767 = vrcp.pop %v763
  %v768 = vrcp.pop %v766
  %v769 = vmul.f32 %v758, %v767
  %v770 = vmul.f32 %v760, %v768
  %v771 = vpack.c.bf16 %v769, %v769
  %v772 = vpack.c.bf16 %v770, %v770
  %773 = vrot.lane.b32.xlu0 %v416, 48
  %v774 = vpop.permute.xlu0 %773
  %v776 = vsel %vm528, %v771, 0
  %v779 = vsel %vm214, %v774, 0
  %781 = vmatprep.subr.bf16.mxu0 0
  %782 = vmatpush1.bf16.msra.mxu0 %v779
  %783 = vmatprep.subr.bf16.mxu0 0
  %784 = vmatpush1.bf16.msra.mxu0 0
  %785 = vmatprep.subr.bf16.mxu0 0
  %786 = vmatpush1.bf16.msra.mxu0 0
  %787 = vmatprep.subr.bf16.mxu0 0
  %788 = vmatpush1.bf16.msra.mxu0 0
  %789 = vmatprep.subr.bf16.mxu0 0
  %790 = vmatpush1.bf16.msra.mxu0 0
  %791 = vmatprep.subr.bf16.mxu0 0
  %792 = vmatpush1.bf16.msra.mxu0 0
  %793 = vmatprep.subr.bf16.mxu0 0
  %794 = vmatpush1.bf16.msra.mxu0 0
  %795 = vmatprep.subr.bf16.mxu0 0
  %796 = vmatpush1.bf16.msra.mxu0 0
  %797 = vmatprep.subr.bf16.mxu0 0
  %798 = vmatpush1.bf16.msra.mxu0 0
  %799 = vmatprep.subr.bf16.mxu0 0
  %800 = vmatpush1.bf16.msra.mxu0 0
  %801 = vmatprep.subr.bf16.mxu0 0
  %802 = vmatpush1.bf16.msra.mxu0 0
  %803 = vmatprep.subr.bf16.mxu0 0
  %804 = vmatpush1.bf16.msra.mxu0 0
  %805 = vmatprep.subr.bf16.mxu0 0
  %806 = vmatpush1.bf16.msra.mxu0 0
  %807 = vmatprep.subr.bf16.mxu0 0
  %808 = vmatpush1.bf16.msra.mxu0 0
  %809 = vmatprep.subr.bf16.mxu0 0
  %810 = vmatpush1.bf16.msra.mxu0 0
  %811 = vmatprep.subr.bf16.mxu0 0
  %812 = vmatpush1.bf16.msra.mxu0 0
  %813 = vmatprep.mubr.bf16.mxu0 0
  %814 = vmatmul.mubr.bf16.gmra.mrb[0].mxu0 %v776
  %v815 = vpop.f32.mrb[0].mxu0
  %v816 = vadd.f32 0.0, %v815
  %v817 = vpop.f32.mrb[0].mxu0
  %v818 = vpop.f32.mrb[0].mxu0
  %v819 = vpop.f32.mrb[0].mxu0
  %820 = vdwg.mxu0
  %821 = vrot.lane.b32.xlu0 %v417, 48
  %v822 = vpop.permute.xlu0 %821
  %v824 = vsel %vm528, %v772, 0
  %v827 = vsel %vm214, %v822, 0
  %829 = vmatprep.subr.bf16.mxu0 0
  %830 = vmatpush1.bf16.msra.mxu0 %v827
  %831 = vmatprep.subr.bf16.mxu0 0
  %832 = vmatpush1.bf16.msra.mxu0 0
  %833 = vmatprep.subr.bf16.mxu0 0
  %834 = vmatpush1.bf16.msra.mxu0 0
  %835 = vmatprep.subr.bf16.mxu0 0
  %836 = vmatpush1.bf16.msra.mxu0 0
  %837 = vmatprep.subr.bf16.mxu0 0
  %838 = vmatpush1.bf16.msra.mxu0 0
  %839 = vmatprep.subr.bf16.mxu0 0
  %840 = vmatpush1.bf16.msra.mxu0 0
  %841 = vmatprep.subr.bf16.mxu0 0
  %842 = vmatpush1.bf16.msra.mxu0 0
  %843 = vmatprep.subr.bf16.mxu0 0
  %844 = vmatpush1.bf16.msra.mxu0 0
  %845 = vmatprep.subr.bf16.mxu0 0
  %846 = vmatpush1.bf16.msra.mxu0 0
  %847 = vmatprep.subr.bf16.mxu0 0
  %848 = vmatpush1.bf16.msra.mxu0 0
  %849 = vmatprep.subr.bf16.mxu0 0
  %850 = vmatpush1.bf16.msra.mxu0 0
  %851 = vmatprep.subr.bf16.mxu0 0
  %852 = vmatpush1.bf16.msra.mxu0 0
  %853 = vmatprep.subr.bf16.mxu0 0
  %854 = vmatpush1.bf16.msra.mxu0 0
  %855 = vmatprep.subr.bf16.mxu0 0
  %856 = vmatpush1.bf16.msra.mxu0 0
  %857 = vmatprep.subr.bf16.mxu0 0
  %858 = vmatpush1.bf16.msra.mxu0 0
  %859 = vmatprep.subr.bf16.mxu0 0
  %860 = vmatpush1.bf16.msra.mxu0 0
  %861 = vmatprep.mubr.bf16.mxu0 0
  %862 = vmatmul.mubr.bf16.gmra.mrb[0].mxu0 %v824
  %v863 = vpop.f32.mrb[0].mxu0
  %v864 = vadd.f32 0.0, %v863
  %v865 = vpop.f32.mrb[0].mxu0
  %v866 = vpop.f32.mrb[0].mxu0
  %v867 = vpop.f32.mrb[0].mxu0
  %868 = vdwg.mxu0
  %871 = vrot.lane.b32.xlu0 %v816, 16
  %v872 = vpop.permute.xlu0 %871
  %873 = vrot.lane.b32.xlu0 %v864, 16
  %v874 = vpop.permute.xlu0 %873
  %v877 = vsel %vm125, %v596, %v872
  %v878 = vsel %vm125, %v644, %v874
  %v879 = vld [vmem:[%s10] sm:$0xff]
  %v880 = vld [vmem:[%s10 + $0x8] sm:$0xff]
  %v881 = vld [vmem:[%s10 + $0x10] sm:$0xff]
  %v882 = vld [vmem:[%s10 + $0x18] sm:$0xff]
  %v883 = vpack.c.bf16 %v878, %v877
  %v884 = vpack.c.bf16 %v880, %v879
  %v885 = vpack.c.bf16 %v882, %v881
  %v886 = vld [vmem:[%s11] sm:$0x1]
  %v888 = vlaneseq
  %v889 = vshrl.u32 %v888, 7
  %v890 = vsub.s32 0, %v889
  %v891 = vrot.slane %v886, %v890
  %v894 = vsel %vm302, %v883, 0
  %896 = vmatprep.subr.bf16.mxu0 0
  %897 = vmatpush1.bf16.msra.mxu0 %v884
  %898 = vmatprep.subr.bf16.mxu0 0
  %899 = vmatpush1.bf16.msra.mxu0 %v885
  %900 = vmatprep.subr.bf16.mxu0 0
  %901 = vmatpush1.bf16.msra.mxu0 0
  %902 = vmatprep.subr.bf16.mxu0 0
  %903 = vmatpush1.bf16.msra.mxu0 0
  %904 = vmatprep.subr.bf16.mxu0 0
  %905 = vmatpush1.bf16.msra.mxu0 0
  %906 = vmatprep.subr.bf16.mxu0 0
  %907 = vmatpush1.bf16.msra.mxu0 0
  %908 = vmatprep.subr.bf16.mxu0 0
  %909 = vmatpush1.bf16.msra.mxu0 0
  %910 = vmatprep.subr.bf16.mxu0 0
  %911 = vmatpush1.bf16.msra.mxu0 0
  %912 = vmatprep.subr.bf16.mxu0 0
  %913 = vmatpush1.bf16.msra.mxu0 0
  %914 = vmatprep.subr.bf16.mxu0 0
  %915 = vmatpush1.bf16.msra.mxu0 0
  %916 = vmatprep.subr.bf16.mxu0 0
  %917 = vmatpush1.bf16.msra.mxu0 0
  %918 = vmatprep.subr.bf16.mxu0 0
  %919 = vmatpush1.bf16.msra.mxu0 0
  %920 = vmatprep.subr.bf16.mxu0 0
  %921 = vmatpush1.bf16.msra.mxu0 0
  %922 = vmatprep.subr.bf16.mxu0 0
  %923 = vmatpush1.bf16.msra.mxu0 0
  %924 = vmatprep.subr.bf16.mxu0 0
  %925 = vmatpush1.bf16.msra.mxu0 0
  %926 = vmatprep.subr.bf16.mxu0 0
  %927 = vmatpush1.bf16.msra.mxu0 0
  %928 = vmatprep.mubr.bf16.mxu0 0
  %929 = vmatmul.mubr.bf16.gmra.mrb[0].mxu0 %v894
  %v930 = vpop.f32.mrb[0].mxu0
  %v931 = vadd.f32 %v891, %v930
  %v932 = vpop.f32.mrb[0].mxu0
  %v933 = vpop.f32.mrb[0].mxu0
  %v934 = vadd.f32 %v891, %v933
  %v935 = vpop.f32.mrb[0].mxu0
  %936 = vdwg.mxu0
  %v937 = vadd.f32 %v931, %v348
  %v938 = vadd.f32 %v934, %v349
  %v939 = vld [vmem:[%s12] sm:$0x1]
  %v940 = vld [vmem:[%s13] sm:$0x1]
  %v941 = vsel %vm302, %v937, 0.0
  %942 = vadd.xlane.f32.xlu0 %v941
  %v943 = vpop.xlane.xlu0 %942
  %v944 = vsel %vm302, %v938, 0.0
  %945 = vadd.xlane.f32.xlu0 %v944
  %v946 = vpop.xlane.xlu0 %945
  %v947 = vmul.f32 %v943, %v309
  %v948 = vmul.f32 %v946, %v309
  %v949 = vmul.f32 %v937, %v937
  %v950 = vmul.f32 %v938, %v938
  %v951 = vsel %vm302, %v949, 0.0
  %952 = vadd.xlane.f32.xlu0 %v951
  %v953 = vpop.xlane.xlu0 %952
  %v954 = vsel %vm302, %v950, 0.0
  %955 = vadd.xlane.f32.xlu0 %v954
  %v956 = vpop.xlane.xlu0 %955
  %v957 = vmul.f32 %v953, %v309
  %v958 = vmul.f32 %v956, %v309
  %v959 = vmul.f32 %v947, %v947
  %v960 = vmul.f32 %v948, %v948
  %v961 = vsub.f32 %v957, %v959
  %v962 = vsub.f32 %v958, %v960
  %v963 = vsub.f32 %v937, %v947
  %v964 = vsub.f32 %v938, %v948
  %v965 = vadd.f32 %v961, 1e-12
  %v966 = vadd.f32 %v962, 1e-12
  %v967 = vrsqrt.pop %v965
  %v968 = vrsqrt.pop %v966
  %v969 = vmul.f32 %v963, %v967
  %v970 = vmul.f32 %v964, %v968
  %v972 = vlaneseq
  %v973 = vshrl.u32 %v972, 7
  %v974 = vsub.s32 0, %v973
  %v975 = vrot.slane %v939, %v974
  %v977 = vmul.f32 %v969, %v975
  %v978 = vmul.f32 %v970, %v975
  %v980 = vlaneseq
  %v981 = vshrl.u32 %v980, 7
  %v982 = vsub.s32 0, %v981
  %v983 = vrot.slane %v940, %v982
  %v985 = vadd.f32 %v977, %v983
  %v986 = vadd.f32 %v978, %v983
  %v987 = vld [vmem:[%s14] sm:$0xff]
  %v988 = vld [vmem:[%s14 + $0x8] sm:$0xff]
  %v989 = vld [vmem:[%s14 + $0x10] sm:$0xff]
  %v990 = vld [vmem:[%s14 + $0x18] sm:$0xff]
  %v991 = vpack.c.bf16 %v986, %v985
  %v992 = vpack.c.bf16 %v988, %v987
  %v993 = vpack.c.bf16 %v990, %v989
  %v994 = vld [vmem:[%s15] sm:$0x1]
  %v996 = vlaneseq
  %v997 = vshrl.u32 %v996, 7
  %v998 = vsub.s32 0, %v997
  %v999 = vrot.slane %v994, %v998
  %v1002 = vsel %vm302, %v991, 0
  %1004 = vmatprep.subr.bf16.mxu0 0
  %1005 = vmatpush1.bf16.msra.mxu0 %v992
  %1006 = vmatprep.subr.bf16.mxu0 0
  %1007 = vmatpush1.bf16.msra.mxu0 %v993
  %1008 = vmatprep.subr.bf16.mxu0 0
  %1009 = vmatpush1.bf16.msra.mxu0 0
  %1010 = vmatprep.subr.bf16.mxu0 0
  %1011 = vmatpush1.bf16.msra.mxu0 0
  %1012 = vmatprep.subr.bf16.mxu0 0
  %1013 = vmatpush1.bf16.msra.mxu0 0
  %1014 = vmatprep.subr.bf16.mxu0 0
  %1015 = vmatpush1.bf16.msra.mxu0 0
  %1016 = vmatprep.subr.bf16.mxu0 0
  %1017 = vmatpush1.bf16.msra.mxu0 0
  %1018 = vmatprep.subr.bf16.mxu0 0
  %1019 = vmatpush1.bf16.msra.mxu0 0
  %1020 = vmatprep.subr.bf16.mxu0 0
  %1021 = vmatpush1.bf16.msra.mxu0 0
  %1022 = vmatprep.subr.bf16.mxu0 0
  %1023 = vmatpush1.bf16.msra.mxu0 0
  %1024 = vmatprep.subr.bf16.mxu0 0
  %1025 = vmatpush1.bf16.msra.mxu0 0
  %1026 = vmatprep.subr.bf16.mxu0 0
  %1027 = vmatpush1.bf16.msra.mxu0 0
  %1028 = vmatprep.subr.bf16.mxu0 0
  %1029 = vmatpush1.bf16.msra.mxu0 0
  %1030 = vmatprep.subr.bf16.mxu0 0
  %1031 = vmatpush1.bf16.msra.mxu0 0
  %1032 = vmatprep.subr.bf16.mxu0 0
  %1033 = vmatpush1.bf16.msra.mxu0 0
  %1034 = vmatprep.subr.bf16.mxu0 0
  %1035 = vmatpush1.bf16.msra.mxu0 0
  %1036 = vmatprep.mubr.bf16.mxu0 0
  %1037 = vmatmul.mubr.bf16.gmra.mrb[0].mxu0 %v1002
  %v1038 = vpop.f32.mrb[0].mxu0
  %v1039 = vadd.f32 %v999, %v1038
  %v1040 = vpop.f32.mrb[0].mxu0
  %v1041 = vpop.f32.mrb[0].mxu0
  %v1042 = vadd.f32 %v999, %v1041
  %v1043 = vpop.f32.mrb[0].mxu0
  %1044 = vdwg.mxu0
  %v1045 = vmul.f32 %v1039, %v1039
  %v1046 = vmul.f32 %v1042, %v1042
  %v1047 = vmul.f32 %v1039, %v1045
  %v1048 = vmul.f32 %v1042, %v1046
  %v1049 = vmul.f32 %v1047, 0.044715
  %v1050 = vmul.f32 %v1048, 0.044715
  %v1051 = vadd.f32 %v1039, %v1049
  %v1052 = vadd.f32 %v1042, %v1050
  %v1053 = vmul.f32 %v1051, 0.7978846
  %v1054 = vmul.f32 %v1052, 0.7978846
  %v1055 = vtanh.pop %v1053
  %v1056 = vtanh.pop %v1054
  %v1057 = vadd.f32 %v1055, 1.0
  %v1058 = vadd.f32 %v1056, 1.0
  %v1059 = vmul.f32 %v1057, 0.5
  %v1060 = vmul.f32 %v1058, 0.5
  %v1061 = vmul.f32 %v1039, %v1059
  %v1062 = vmul.f32 %v1042, %v1060
  %v1063 = vld [vmem:[%s16] sm:$0xff]
  %v1064 = vld [vmem:[%s16 + $0x8] sm:$0xff]
  %v1065 = vld [vmem:[%s16 + $0x10] sm:$0xff]
  %v1066 = vld [vmem:[%s16 + $0x18] sm:$0xff]
  %v1067 = vld [vmem:[%s16 + $0x20] sm:$0xff]
  %v1068 = vld [vmem:[%s16 + $0x28] sm:$0xff]
  %v1069 = vld [vmem:[%s16 + $0x30] sm:$0xff]
  %v1070 = vld [vmem:[%s16 + $0x38] sm:$0xff]
  %v1071 = vpack.c.bf16 %v1062, %v1061
  %v1072 = vpack.c.bf16 %v1064, %v1063
  %v1073 = vpack.c.bf16 %v1066, %v1065
  %v1074 = vpack.c.bf16 %v1068, %v1067
  %v1075 = vpack.c.bf16 %v1070, %v1069
  %v1076 = vld [vmem:[%s17] sm:$0x1]
  %v1078 = vlaneseq
  %v1079 = vshrl.u32 %v1078, 7
  %v1080 = vsub.s32 0, %v1079
  %v1081 = vrot.slane %v1076, %v1080
  %vm1083 = vcmask 523264
  %v1085 = vsel %vm1083, %v1071, 0
  %1087 = vmatprep.subr.bf16.mxu0 0
  %1088 = vmatpush1.bf16.msra.mxu0 %v1072
  %1089 = vmatprep.subr.bf16.mxu0 0
  %1090 = vmatpush1.bf16.msra.mxu0 %v1073
  %1091 = vmatprep.subr.bf16.mxu0 0
  %1092 = vmatpush1.bf16.msra.mxu0 %v1074
  %1093 = vmatprep.subr.bf16.mxu0 0
  %1094 = vmatpush1.bf16.msra.mxu0 %v1075
  %1095 = vmatprep.subr.bf16.mxu0 0
  %1096 = vmatpush1.bf16.msra.mxu0 0
  %1097 = vmatprep.subr.bf16.mxu0 0
  %1098 = vmatpush1.bf16.msra.mxu0 0
  %1099 = vmatprep.subr.bf16.mxu0 0
  %1100 = vmatpush1.bf16.msra.mxu0 0
  %1101 = vmatprep.subr.bf16.mxu0 0
  %1102 = vmatpush1.bf16.msra.mxu0 0
  %1103 = vmatprep.subr.bf16.mxu0 0
  %1104 = vmatpush1.bf16.msra.mxu0 0
  %1105 = vmatprep.subr.bf16.mxu0 0
  %1106 = vmatpush1.bf16.msra.mxu0 0
  %1107 = vmatprep.subr.bf16.mxu0 0
  %1108 = vmatpush1.bf16.msra.mxu0 0
  %1109 = vmatprep.subr.bf16.mxu0 0
  %1110 = vmatpush1.bf16.msra.mxu0 0
  %1111 = vmatprep.subr.bf16.mxu0 0
  %1112 = vmatpush1.bf16.msra.mxu0 0
  %1113 = vmatprep.subr.bf16.mxu0 0
  %1114 = vmatpush1.bf16.msra.mxu0 0
  %1115 = vmatprep.subr.bf16.mxu0 0
  %1116 = vmatpush1.bf16.msra.mxu0 0
  %1117 = vmatprep.subr.bf16.mxu0 0
  %1118 = vmatpush1.bf16.msra.mxu0 0
  %1119 = vmatprep.mubr.bf16.mxu0 0
  %1120 = vmatmul.mubr.bf16.gmra.mrb[0].mxu0 %v1085
  %v1121 = vpop.f32.mrb[0].mxu0
  %v1122 = vadd.f32 %v1081, %v1121
  %v1123 = vpop.f32.mrb[0].mxu0
  %v1124 = vpop.f32.mrb[0].mxu0
  %v1125 = vadd.f32 %v1081, %v1124
  %v1126 = vpop.f32.mrb[0].mxu0
  %1127 = vdwg.mxu0
  %v1128 = vadd.f32 %v1122, %v985
  %v1129 = vadd.f32 %v1125, %v986
  %v1130 = vld [vmem:[%s18] sm:$0x1]
  %v1131 = vld [vmem:[%s19] sm:$0x1]
  %v1132 = vsel %vm302, %v1128, 0.0
  %1133 = vadd.xlane.f32.xlu0 %v1132
  %v1134 = vpop.xlane.xlu0 %1133
  %v1135 = vsel %vm302, %v1129, 0.0
  %1136 = vadd.xlane.f32.xlu0 %v1135
  %v1137 = vpop.xlane.xlu0 %1136
  %v1138 = vmul.f32 %v1134, %v309
  %v1139 = vmul.f32 %v1137, %v309
  %v1140 = vmul.f32 %v1128, %v1128
  %v1141 = vmul.f32 %v1129, %v1129
  %v1142 = vsel %vm302, %v1140, 0.0
  %1143 = vadd.xlane.f32.xlu0 %v1142
  %v1144 = vpop.xlane.xlu0 %1143
  %v1145 = vsel %vm302, %v1141, 0.0
  %1146 = vadd.xlane.f32.xlu0 %v1145
  %v1147 = vpop.xlane.xlu0 %1146
  %v1148 = vmul.f32 %v1144, %v309
  %v1149 = vmul.f32 %v1147, %v309
  %v1150 = vmul.f32 %v1138, %v1138
  %v1151 = vmul.f32 %v1139, %v1139
  %v1152 = vsub.f32 %v1148, %v1150
  %v1153 = vsub.f32 %v1149, %v1151
  %v1154 = vsub.f32 %v1128, %v1138
  %v1155 = vsub.f32 %v1129, %v1139
  %v1156 = vadd.f32 %v1152, 1e-12
  %v1157 = vadd.f32 %v1153, 1e-12
  %v1158 = vrsqrt.pop %v1156
  %v1159 = vrsqrt.pop %v1157
  %v1160 = vmul.f32 %v1154, %v1158
  %v1161 = vmul.f32 %v1155, %v1159
  %v1163 = vlaneseq
  %v1164 = vshrl.u32 %v1163, 7
  %v1165 = vsub.s32 0, %v1164
  %v1166 = vrot.slane %v1130, %v1165
  %v1168 = vmul.f32 %v1160, %v1166
  %v1169 = vmul.f32 %v1161, %v1166
  %v1171 = vlaneseq
  %v1172 = vshrl.u32 %v1171, 7
  %v1173 = vsub.s32 0, %v1172
  %v1174 = vrot.slane %v1131, %v1173
  %v1176 = vadd.f32 %v1168, %v1174
  %v1177 = vadd.f32 %v1169, %v1174
  %s1178 = scalar_lea.vmem %s8, 32
  %v1179 = vld [vmem:[%s1178] sm:$0xff]
  %v1180 = vld [vmem:[%s1178 + $0x8] sm:$0xff]
  %v1181 = vld [vmem:[%s1178 + $0x10] sm:$0xff]
  %v1182 = vld [vmem:[%s1178 + $0x18] sm:$0xff]
  %v1183 = vpack.c.bf16 %v1177, %v1176
  %v1184 = vpack.c.bf16 %v1180, %v1179
  %v1185 = vpack.c.bf16 %v1182, %v1181
  %s1186 = scalar_lea.vmem %s9, 1
  %v1187 = vld [vmem:[%s1186] sm:$0x1]
  %v1189 = vlaneseq
  %v1190 = vshrl.u32 %v1189, 7
  %v1191 = vsub.s32 0, %v1190
  %v1192 = vrot.slane %v1187, %v1191
  %v1195 = vsel %vm302, %v1183, 0
  %1197 = vmatprep.subr.bf16.mxu0 0
  %1198 = vmatpush1.bf16.msra.mxu0 %v1184
  %1199 = vmatprep.subr.bf16.mxu0 0
  %1200 = vmatpush1.bf16.msra.mxu0 %v1185
  %1201 = vmatprep.subr.bf16.mxu0 0
  %1202 = vmatpush1.bf16.msra.mxu0 0
  %1203 = vmatprep.subr.bf16.mxu0 0
  %1204 = vmatpush1.bf16.msra.mxu0 0
  %1205 = vmatprep.subr.bf16.mxu0 0
  %1206 = vmatpush1.bf16.msra.mxu0 0
  %1207 = vmatprep.subr.bf16.mxu0 0
  %1208 = vmatpush1.bf16.msra.mxu0 0
  %1209 = vmatprep.subr.bf16.mxu0 0
  %1210 = vmatpush1.bf16.msra.mxu0 0
  %1211 = vmatprep.subr.bf16.mxu0 0
  %1212 = vmatpush1.bf16.msra.mxu0 0
  %1213 = vmatprep.subr.bf16.mxu0 0
  %1214 = vmatpush1.bf16.msra.mxu0 0
  %1215 = vmatprep.subr.bf16.mxu0 0
  %1216 = vmatpush1.bf16.msra.mxu0 0
  %1217 = vmatprep.subr.bf16.mxu0 0
  %1218 = vmatpush1.bf16.msra.mxu0 0
  %1219 = vmatprep.subr.bf16.mxu0 0
  %1220 = vmatpush1.bf16.msra.mxu0 0
  %1221 = vmatprep.subr.bf16.mxu0 0
  %1222 = vmatpush1.bf16.msra.mxu0 0
  %1223 = vmatprep.subr.bf16.mxu0 0
  %1224 = vmatpush1.bf16.msra.mxu0 0
  %1225 = vmatprep.subr.bf16.mxu0 0
  %1226 = vmatpush1.bf16.msra.mxu0 0
  %1227 = vmatprep.subr.bf16.mxu0 0
  %1228 = vmatpush1.bf16.msra.mxu0 0
  %1229 = vmatprep.mubr.bf16.mxu0 0
  %1230 = vmatmul.mubr.bf16.gmra.mrb[0].mxu0 %v1195
  %v1231 = vpop.f32.mrb[0].mxu0
  %v1232 = vadd.f32 %v1192, %v1231
  %v1233 = vpop.f32.mrb[0].mxu0
  %v1234 = vpop.f32.mrb[0].mxu0
  %v1235 = vadd.f32 %v1192, %v1234
  %v1236 = vpop.f32.mrb[0].mxu0
  %1237 = vdwg.mxu0
  %v1238 = vpack.c.bf16 %v1232, %v1232
  %v1239 = vpack.c.bf16 %v1235, %v1235
  %1241 = vrot.lane.b32.xlu0 %v1238, 96
  %v1242 = vpop.permute.xlu0 %1241
  %v1244 = vsel %vm125, %v1238, 0
  %v1247 = vsel %vm125, %v1242, 0
  %1249 = vmatprep.subr.bf16.mxu0 0
  %1250 = vmatpush1.bf16.xpose.msra.mxu0 %v1247
  %1251 = vmatprep.subr.bf16.mxu0 0
  %1252 = vmatpush1.bf16.xpose.msra.mxu0 0
  %1253 = vmatprep.subr.bf16.mxu0 0
  %1254 = vmatpush1.bf16.xpose.msra.mxu0 0
  %1255 = vmatprep.subr.bf16.mxu0 0
  %1256 = vmatpush1.bf16.xpose.msra.mxu0 0
  %1257 = vmatprep.subr.bf16.mxu0 0
  %1258 = vmatpush1.bf16.xpose.msra.mxu0 0
  %1259 = vmatprep.subr.bf16.mxu0 0
  %1260 = vmatpush1.bf16.xpose.msra.mxu0 0
  %1261 = vmatprep.subr.bf16.mxu0 0
  %1262 = vmatpush1.bf16.xpose.msra.mxu0 0
  %1263 = vmatprep.subr.bf16.mxu0 0
  %1264 = vmatpush1.bf16.xpose.msra.mxu0 0
  %1265 = vmatprep.subr.bf16.mxu0 0
  %1266 = vmatpush1.bf16.xpose.msra.mxu0 0
  %1267 = vmatprep.subr.bf16.mxu0 0
  %1268 = vmatpush1.bf16.xpose.msra.mxu0 0
  %1269 = vmatprep.subr.bf16.mxu0 0
  %1270 = vmatpush1.bf16.xpose.msra.mxu0 0
  %1271 = vmatprep.subr.bf16.mxu0 0
  %1272 = vmatpush1.bf16.xpose.msra.mxu0 0
  %1273 = vmatprep.subr.bf16.mxu0 0
  %1274 = vmatpush1.bf16.xpose.msra.mxu0 0
  %1275 = vmatprep.subr.bf16.mxu0 0
  %1276 = vmatpush1.bf16.xpose.msra.mxu0 0
  %1277 = vmatprep.subr.bf16.mxu0 0
  %1278 = vmatpush1.bf16.xpose.msra.mxu0 0
  %1279 = vmatprep.subr.bf16.mxu0 0
  %1280 = vmatpush1.bf16.xpose.msra.mxu0 0
  %1281 = vmatprep.mubr.bf16.mxu0 0
  %1282 = vmatmul.mubr.bf16.gmra.mrb[0].mxu0 %v1244
  %v1283 = vpop.f32.mrb[0].mxu0
  %v1284 = vadd.f32 %v423, %v1283
  %v1285 = vpop.f32.mrb[0].mxu0
  %v1286 = vpop.f32.mrb[0].mxu0
  %v1287 = vpop.f32.mrb[0].mxu0
  %1288 = vdwg.mxu0
  %1290 = vrot.lane.b32.xlu0 %v1239, 96
  %v1291 = vpop.permute.xlu0 %1290
  %v1293 = vsel %vm125, %v1239, 0
  %v1296 = vsel %vm125, %v1291, 0
  %1298 = vmatprep.subr.bf16.mxu0 0
  %1299 = vmatpush1.bf16.xpose.msra.mxu0 %v1296
  %1300 = vmatprep.subr.bf16.mxu0 0
  %1301 = vmatpush1.bf16.xpose.msra.mxu0 0
  %1302 = vmatprep.subr.bf16.mxu0 0
  %1303 = vmatpush1.bf16.xpose.msra.mxu0 0
  %1304 = vmatprep.subr.bf16.mxu0 0
  %1305 = vmatpush1.bf16.xpose.msra.mxu0 0
  %1306 = vmatprep.subr.bf16.mxu0 0
  %1307 = vmatpush1.bf16.xpose.msra.mxu0 0
  %1308 = vmatprep.subr.bf16.mxu0 0
  %1309 = vmatpush1.bf16.xpose.msra.mxu0 0
  %1310 = vmatprep.subr.bf16.mxu0 0
  %1311 = vmatpush1.bf16.xpose.msra.mxu0 0
  %1312 = vmatprep.subr.bf16.mxu0 0
  %1313 = vmatpush1.bf16.xpose.msra.mxu0 0
  %1314 = vmatprep.subr.bf16.mxu0 0
  %1315 = vmatpush1.bf16.xpose.msra.mxu0 0
  %1316 = vmatprep.subr.bf16.mxu0 0
  %1317 = vmatpush1.bf16.xpose.msra.mxu0 0
  %1318 = vmatprep.subr.bf16.mxu0 0
  %1319 = vmatpush1.bf16.xpose.msra.mxu0 0
  %1320 = vmatprep.subr.bf16.mxu0 0
  %1321 = vmatpush1.bf16.xpose.msra.mxu0 0
  %1322 = vmatprep.subr.bf16.mxu0 0
  %1323 = vmatpush1.bf16.xpose.msra.mxu0 0
  %1324 = vmatprep.subr.bf16.mxu0 0
  %1325 = vmatpush1.bf16.xpose.msra.mxu0 0
  %1326 = vmatprep.subr.bf16.mxu0 0
  %1327 = vmatpush1.bf16.xpose.msra.mxu0 0
  %1328 = vmatprep.subr.bf16.mxu0 0
  %1329 = vmatpush1.bf16.xpose.msra.mxu0 0
  %1330 = vmatprep.mubr.bf16.mxu0 0
  %1331 = vmatmul.mubr.bf16.gmra.mrb[0].mxu0 %v1293
  %v1332 = vpop.f32.mrb[0].mxu0
  %v1333 = vadd.f32 %v427, %v1332
  %v1334 = vpop.f32.mrb[0].mxu0
  %v1335 = vpop.f32.mrb[0].mxu0
  %v1336 = vpop.f32.mrb[0].mxu0
  %1337 = vdwg.mxu0
  %v1338 = vsel %vm528, %v1284, -inf
  %1339 = vmax.xlane.f32.xlu0 %v1338
  %v1340 = vpop.xlane.xlu0 %1339
  %v1341 = vsel %vm528, %v1333, -inf
  %1342 = vmax.xlane.f32.xlu0 %v1341
  %v1343 = vpop.xlane.xlu0 %1342
  %v1344 = vsub.f32 %v1284, %v1340
  %v1345 = vsub.f32 %v1333, %v1343
  %v1346 = vmul.f32 %v1344, 1.442695
  %v1347 = vpow.pop %v1346
  %v1348 = vmul.f32 %v1345, 1.442695
  %v1349 = vpow.pop %v1348
  %v1350 = vsel %vm528, %v1347, 0.0
  %1351 = vadd.xlane.f32.xlu0 %v1350
  %v1352 = vpop.xlane.xlu0 %1351
  %v1353 = vsel %vm528, %v1349, 0.0
  %1354 = vadd.xlane.f32.xlu0 %v1353
  %v1355 = vpop.xlane.xlu0 %1354
  %v1356 = vrcp.pop %v1352
  %v1357 = vrcp.pop %v1355
  %v1358 = vmul.f32 %v1347, %v1356
  %v1359 = vmul.f32 %v1349, %v1357
  %v1360 = vpack.c.bf16 %v1358, %v1358
  %v1361 = vpack.c.bf16 %v1359, %v1359
  %1362 = vrot.lane.b32.xlu0 %v1238, 64
  %v1363 = vpop.permute.xlu0 %1362
  %v1365 = vsel %vm528, %v1360, 0
  %v1368 = vsel %vm214, %v1363, 0
  %1370 = vmatprep.subr.bf16.mxu0 0
  %1371 = vmatpush1.bf16.msra.mxu0 %v1368
  %1372 = vmatprep.subr.bf16.mxu0 0
  %1373 = vmatpush1.bf16.msra.mxu0 0
  %1374 = vmatprep.subr.bf16.mxu0 0
  %1375 = vmatpush1.bf16.msra.mxu0 0
  %1376 = vmatprep.subr.bf16.mxu0 0
  %1377 = vmatpush1.bf16.msra.mxu0 0
  %1378 = vmatprep.subr.bf16.mxu0 0
  %1379 = vmatpush1.bf16.msra.mxu0 0
  %1380 = vmatprep.subr.bf16.mxu0 0
  %1381 = vmatpush1.bf16.msra.mxu0 0
  %1382 = vmatprep.subr.bf16.mxu0 0
  %1383 = vmatpush1.bf16.msra.mxu0 0
  %1384 = vmatprep.subr.bf16.mxu0 0
  %1385 = vmatpush1.bf16.msra.mxu0 0
  %1386 = vmatprep.subr.bf16.mxu0 0
  %1387 = vmatpush1.bf16.msra.mxu0 0
  %1388 = vmatprep.subr.bf16.mxu0 0
  %1389 = vmatpush1.bf16.msra.mxu0 0
  %1390 = vmatprep.subr.bf16.mxu0 0
  %1391 = vmatpush1.bf16.msra.mxu0 0
  %1392 = vmatprep.subr.bf16.mxu0 0
  %1393 = vmatpush1.bf16.msra.mxu0 0
  %1394 = vmatprep.subr.bf16.mxu0 0
  %1395 = vmatpush1.bf16.msra.mxu0 0
  %1396 = vmatprep.subr.bf16.mxu0 0
  %1397 = vmatpush1.bf16.msra.mxu0 0
  %1398 = vmatprep.subr.bf16.mxu0 0
  %1399 = vmatpush1.bf16.msra.mxu0 0
  %1400 = vmatprep.subr.bf16.mxu0 0
  %1401 = vmatpush1.bf16.msra.mxu0 0
  %1402 = vmatprep.mubr.bf16.mxu0 0
  %1403 = vmatmul.mubr.bf16.gmra.mrb[0].mxu0 %v1365
  %v1404 = vpop.f32.mrb[0].mxu0
  %v1405 = vadd.f32 0.0, %v1404
  %v1406 = vpop.f32.mrb[0].mxu0
  %v1407 = vpop.f32.mrb[0].mxu0
  %v1408 = vpop.f32.mrb[0].mxu0
  %1409 = vdwg.mxu0
  %1410 = vrot.lane.b32.xlu0 %v1239, 64
  %v1411 = vpop.permute.xlu0 %1410
  %v1413 = vsel %vm528, %v1361, 0
  %v1416 = vsel %vm214, %v1411, 0
  %1418 = vmatprep.subr.bf16.mxu0 0
  %1419 = vmatpush1.bf16.msra.mxu0 %v1416
  %1420 = vmatprep.subr.bf16.mxu0 0
  %1421 = vmatpush1.bf16.msra.mxu0 0
  %1422 = vmatprep.subr.bf16.mxu0 0
  %1423 = vmatpush1.bf16.msra.mxu0 0
  %1424 = vmatprep.subr.bf16.mxu0 0
  %1425 = vmatpush1.bf16.msra.mxu0 0
  %1426 = vmatprep.subr.bf16.mxu0 0
  %1427 = vmatpush1.bf16.msra.mxu0 0
  %1428 = vmatprep.subr.bf16.mxu0 0
  %1429 = vmatpush1.bf16.msra.mxu0 0
  %1430 = vmatprep.subr.bf16.mxu0 0
  %1431 = vmatpush1.bf16.msra.mxu0 0
  %1432 = vmatprep.subr.bf16.mxu0 0
  %1433 = vmatpush1.bf16.msra.mxu0 0
  %1434 = vmatprep.subr.bf16.mxu0 0
  %1435 = vmatpush1.bf16.msra.mxu0 0
  %1436 = vmatprep.subr.bf16.mxu0 0
  %1437 = vmatpush1.bf16.msra.mxu0 0
  %1438 = vmatprep.subr.bf16.mxu0 0
  %1439 = vmatpush1.bf16.msra.mxu0 0
  %1440 = vmatprep.subr.bf16.mxu0 0
  %1441 = vmatpush1.bf16.msra.mxu0 0
  %1442 = vmatprep.subr.bf16.mxu0 0
  %1443 = vmatpush1.bf16.msra.mxu0 0
  %1444 = vmatprep.subr.bf16.mxu0 0
  %1445 = vmatpush1.bf16.msra.mxu0 0
  %1446 = vmatprep.subr.bf16.mxu0 0
  %1447 = vmatpush1.bf16.msra.mxu0 0
  %1448 = vmatprep.subr.bf16.mxu0 0
  %1449 = vmatpush1.bf16.msra.mxu0 0
  %1450 = vmatprep.mubr.bf16.mxu0 0
  %1451 = vmatmul.mubr.bf16.gmra.mrb[0].mxu0 %v1413
  %v1452 = vpop.f32.mrb[0].mxu0
  %v1453 = vadd.f32 0.0, %v1452
  %v1454 = vpop.f32.mrb[0].mxu0
  %v1455 = vpop.f32.mrb[0].mxu0
  %v1456 = vpop.f32.mrb[0].mxu0
  %1457 = vdwg.mxu0
  %1458 = vrot.lane.b32.xlu0 %v1238, 112
  %v1459 = vpop.permute.xlu0 %1458
  %1460 = vrot.lane.b32.xlu0 %v1238, 80
  %v1461 = vpop.permute.xlu0 %1460
  %v1463 = vsel %vm125, %v1459, 0
  %v1466 = vsel %vm125, %v1461, 0
  %1468 = vmatprep.subr.bf16.mxu0 0
  %1469 = vmatpush1.bf16.xpose.msra.mxu0 %v1466
  %1470 = vmatprep.subr.bf16.mxu0 0
  %1471 = vmatpush1.bf16.xpose.msra.mxu0 0
  %1472 = vmatprep.subr.bf16.mxu0 0
  %1473 = vmatpush1.bf16.xpose.msra.mxu0 0
  %1474 = vmatprep.subr.bf16.mxu0 0
  %1475 = vmatpush1.bf16.xpose.msra.mxu0 0
  %1476 = vmatprep.subr.bf16.mxu0 0
  %1477 = vmatpush1.bf16.xpose.msra.mxu0 0
  %1478 = vmatprep.subr.bf16.mxu0 0
  %1479 = vmatpush1.bf16.xpose.msra.mxu0 0
  %1480 = vmatprep.subr.bf16.mxu0 0
  %1481 = vmatpush1.bf16.xpose.msra.mxu0 0
  %1482 = vmatprep.subr.bf16.mxu0 0
  %1483 = vmatpush1.bf16.xpose.msra.mxu0 0
  %1484 = vmatprep.subr.bf16.mxu0 0
  %1485 = vmatpush1.bf16.xpose.msra.mxu0 0
  %1486 = vmatprep.subr.bf16.mxu0 0
  %1487 = vmatpush1.bf16.xpose.msra.mxu0 0
  %1488 = vmatprep.subr.bf16.mxu0 0
  %1489 = vmatpush1.bf16.xpose.msra.mxu0 0
  %1490 = vmatprep.subr.bf16.mxu0 0
  %1491 = vmatpush1.bf16.xpose.msra.mxu0 0
  %1492 = vmatprep.subr.bf16.mxu0 0
  %1493 = vmatpush1.bf16.xpose.msra.mxu0 0
  %1494 = vmatprep.subr.bf16.mxu0 0
  %1495 = vmatpush1.bf16.xpose.msra.mxu0 0
  %1496 = vmatprep.subr.bf16.mxu0 0
  %1497 = vmatpush1.bf16.xpose.msra.mxu0 0
  %1498 = vmatprep.subr.bf16.mxu0 0
  %1499 = vmatpush1.bf16.xpose.msra.mxu0 0
  %1500 = vmatprep.mubr.bf16.mxu0 0
  %1501 = vmatmul.mubr.bf16.gmra.mrb[0].mxu0 %v1463
  %v1502 = vpop.f32.mrb[0].mxu0
  %v1503 = vadd.f32 %v423, %v1502
  %v1504 = vpop.f32.mrb[0].mxu0
  %v1505 = vpop.f32.mrb[0].mxu0
  %v1506 = vpop.f32.mrb[0].mxu0
  %1507 = vdwg.mxu0
  %1508 = vrot.lane.b32.xlu0 %v1239, 112
  %v1509 = vpop.permute.xlu0 %1508
  %1510 = vrot.lane.b32.xlu0 %v1239, 80
  %v1511 = vpop.permute.xlu0 %1510
  %v1513 = vsel %vm125, %v1509, 0
  %v1516 = vsel %vm125, %v1511, 0
  %1518 = vmatprep.subr.bf16.mxu0 0
  %1519 = vmatpush1.bf16.xpose.msra.mxu0 %v1516
  %1520 = vmatprep.subr.bf16.mxu0 0
  %1521 = vmatpush1.bf16.xpose.msra.mxu0 0
  %1522 = vmatprep.subr.bf16.mxu0 0
  %1523 = vmatpush1.bf16.xpose.msra.mxu0 0
  %1524 = vmatprep.subr.bf16.mxu0 0
  %1525 = vmatpush1.bf16.xpose.msra.mxu0 0
  %1526 = vmatprep.subr.bf16.mxu0 0
  %1527 = vmatpush1.bf16.xpose.msra.mxu0 0
  %1528 = vmatprep.subr.bf16.mxu0 0
  %1529 = vmatpush1.bf16.xpose.msra.mxu0 0
  %1530 = vmatprep.subr.bf16.mxu0 0
  %1531 = vmatpush1.bf16.xpose.msra.mxu0 0
  %1532 = vmatprep.subr.bf16.mxu0 0
  %1533 = vmatpush1.bf16.xpose.msra.mxu0 0
  %1534 = vmatprep.subr.bf16.mxu0 0
  %1535 = vmatpush1.bf16.xpose.msra.mxu0 0
  %1536 = vmatprep.subr.bf16.mxu0 0
  %1537 = vmatpush1.bf16.xpose.msra.mxu0 0
  %1538 = vmatprep.subr.bf16.mxu0 0
  %1539 = vmatpush1.bf16.xpose.msra.mxu0 0
  %1540 = vmatprep.subr.bf16.mxu0 0
  %1541 = vmatpush1.bf16.xpose.msra.mxu0 0
  %1542 = vmatprep.subr.bf16.mxu0 0
  %1543 = vmatpush1.bf16.xpose.msra.mxu0 0
  %1544 = vmatprep.subr.bf16.mxu0 0
  %1545 = vmatpush1.bf16.xpose.msra.mxu0 0
  %1546 = vmatprep.subr.bf16.mxu0 0
  %1547 = vmatpush1.bf16.xpose.msra.mxu0 0
  %1548 = vmatprep.subr.bf16.mxu0 0
  %1549 = vmatpush1.bf16.xpose.msra.mxu0 0
  %1550 = vmatprep.mubr.bf16.mxu0 0
  %1551 = vmatmul.mubr.bf16.gmra.mrb[0].mxu0 %v1513
  %v1552 = vpop.f32.mrb[0].mxu0
  %v1553 = vadd.f32 %v427, %v1552
  %v1554 = vpop.f32.mrb[0].mxu0
  %v1555 = vpop.f32.mrb[0].mxu0
  %v1556 = vpop.f32.mrb[0].mxu0
  %1557 = vdwg.mxu0
  %v1558 = vsel %vm528, %v1503, -inf
  %1559 = vmax.xlane.f32.xlu0 %v1558
  %v1560 = vpop.xlane.xlu0 %1559
  %v1561 = vsel %vm528, %v1553, -inf
  %1562 = vmax.xlane.f32.xlu0 %v1561
  %v1563 = vpop.xlane.xlu0 %1562
  %v1564 = vsub.f32 %v1503, %v1560
  %v1565 = vsub.f32 %v1553, %v1563
  %v1566 = vmul.f32 %v1564, 1.442695
  %v1567 = vpow.pop %v1566
  %v1568 = vmul.f32 %v1565, 1.442695
  %v1569 = vpow.pop %v1568
  %v1570 = vsel %vm528, %v1567, 0.0
  %1571 = vadd.xlane.f32.xlu0 %v1570
  %v1572 = vpop.xlane.xlu0 %1571
  %v1573 = vsel %vm528, %v1569, 0.0
  %1574 = vadd.xlane.f32.xlu0 %v1573
  %v1575 = vpop.xlane.xlu0 %1574
  %v1576 = vrcp.pop %v1572
  %v1577 = vrcp.pop %v1575
  %v1578 = vmul.f32 %v1567, %v1576
  %v1579 = vmul.f32 %v1569, %v1577
  %v1580 = vpack.c.bf16 %v1578, %v1578
  %v1581 = vpack.c.bf16 %v1579, %v1579
  %1582 = vrot.lane.b32.xlu0 %v1238, 48
  %v1583 = vpop.permute.xlu0 %1582
  %v1585 = vsel %vm528, %v1580, 0
  %v1588 = vsel %vm214, %v1583, 0
  %1590 = vmatprep.subr.bf16.mxu0 0
  %1591 = vmatpush1.bf16.msra.mxu0 %v1588
  %1592 = vmatprep.subr.bf16.mxu0 0
  %1593 = vmatpush1.bf16.msra.mxu0 0
  %1594 = vmatprep.subr.bf16.mxu0 0
  %1595 = vmatpush1.bf16.msra.mxu0 0
  %1596 = vmatprep.subr.bf16.mxu0 0
  %1597 = vmatpush1.bf16.msra.mxu0 0
  %1598 = vmatprep.subr.bf16.mxu0 0
  %1599 = vmatpush1.bf16.msra.mxu0 0
  %1600 = vmatprep.subr.bf16.mxu0 0
  %1601 = vmatpush1.bf16.msra.mxu0 0
  %1602 = vmatprep.subr.bf16.mxu0 0
  %1603 = vmatpush1.bf16.msra.mxu0 0
  %1604 = vmatprep.subr.bf16.mxu0 0
  %1605 = vmatpush1.bf16.msra.mxu0 0
  %1606 = vmatprep.subr.bf16.mxu0 0
  %1607 = vmatpush1.bf16.msra.mxu0 0
  %1608 = vmatprep.subr.bf16.mxu0 0
  %1609 = vmatpush1.bf16.msra.mxu0 0
  %1610 = vmatprep.subr.bf16.mxu0 0
  %1611 = vmatpush1.bf16.msra.mxu0 0
  %1612 = vmatprep.subr.bf16.mxu0 0
  %1613 = vmatpush1.bf16.msra.mxu0 0
  %1614 = vmatprep.subr.bf16.mxu0 0
  %1615 = vmatpush1.bf16.msra.mxu0 0
  %1616 = vmatprep.subr.bf16.mxu0 0
  %1617 = vmatpush1.bf16.msra.mxu0 0
  %1618 = vmatprep.subr.bf16.mxu0 0
  %1619 = vmatpush1.bf16.msra.mxu0 0
  %1620 = vmatprep.subr.bf16.mxu0 0
  %1621 = vmatpush1.bf16.msra.mxu0 0
  %1622 = vmatprep.mubr.bf16.mxu0 0
  %1623 = vmatmul.mubr.bf16.gmra.mrb[0].mxu0 %v1585
  %v1624 = vpop.f32.mrb[0].mxu0
  %v1625 = vadd.f32 0.0, %v1624
  %v1626 = vpop.f32.mrb[0].mxu0
  %v1627 = vpop.f32.mrb[0].mxu0
  %v1628 = vpop.f32.mrb[0].mxu0
  %1629 = vdwg.mxu0
  %1630 = vrot.lane.b32.xlu0 %v1239, 48
  %v1631 = vpop.permute.xlu0 %1630
  %v1633 = vsel %vm528, %v1581, 0
  %v1636 = vsel %vm214, %v1631, 0
  %1638 = vmatprep.subr.bf16.mxu0 0
  %1639 = vmatpush1.bf16.msra.mxu0 %v1636
  %1640 = vmatprep.subr.bf16.mxu0 0
  %1641 = vmatpush1.bf16.msra.mxu0 0
  %1642 = vmatprep.subr.bf16.mxu0 0
  %1643 = vmatpush1.bf16.msra.mxu0 0
  %1644 = vmatprep.subr.bf16.mxu0 0
  %1645 = vmatpush1.bf16.msra.mxu0 0
  %1646 = vmatprep.subr.bf16.mxu0 0
  %1647 = vmatpush1.bf16.msra.mxu0 0
  %1648 = vmatprep.subr.bf16.mxu0 0
  %1649 = vmatpush1.bf16.msra.mxu0 0
  %1650 = vmatprep.subr.bf16.mxu0 0
  %1651 = vmatpush1.bf16.msra.mxu0 0
  %1652 = vmatprep.subr.bf16.mxu0 0
  %1653 = vmatpush1.bf16.msra.mxu0 0
  %1654 = vmatprep.subr.bf16.mxu0 0
  %1655 = vmatpush1.bf16.msra.mxu0 0
  %1656 = vmatprep.subr.bf16.mxu0 0
  %1657 = vmatpush1.bf16.msra.mxu0 0
  %1658 = vmatprep.subr.bf16.mxu0 0
  %1659 = vmatpush1.bf16.msra.mxu0 0
  %1660 = vmatprep.subr.bf16.mxu0 0
  %1661 = vmatpush1.bf16.msra.mxu0 0
  %1662 = vmatprep.subr.bf16.mxu0 0
  %1663 = vmatpush1.bf16.msra.mxu0 0
  %1664 = vmatprep.subr.bf16.mxu0 0
  %1665 = vmatpush1.bf16.msra.mxu0 0
  %1666 = vmatprep.subr.bf16.mxu0 0
  %1667 = vmatpush1.bf16.msra.mxu0 0
  %1668 = vmatprep.subr.bf16.mxu0 0
  %1669 = vmatpush1.bf16.msra.mxu0 0
  %1670 = vmatprep.mubr.bf16.mxu0 0
  %1671 = vmatmul.mubr.bf16.gmra.mrb[0].mxu0 %v1633
  %v1672 = vpop.f32.mrb[0].mxu0
  %v1673 = vadd.f32 0.0, %v1672
  %v1674 = vpop.f32.mrb[0].mxu0
  %v1675 = vpop.f32.mrb[0].mxu0
  %v1676 = vpop.f32.mrb[0].mxu0
  %1677 = vdwg.mxu0
  %1680 = vrot.lane.b32.xlu0 %v1625, 16
  %v1681 = vpop.permute.xlu0 %1680
  %1682 = vrot.lane.b32.xlu0 %v1673, 16
  %v1683 = vpop.permute.xlu0 %1682
  %v1686 = vsel %vm125, %v1405, %v1681
  %v1687 = vsel %vm125, %v1453, %v1683
  %s1688 = scalar_lea.vmem %s10, 32
  %v1689 = vld [vmem:[%s1688] sm:$0xff]
  %v1690 = vld [vmem:[%s1688 + $0x8] sm:$0xff]
  %v1691 = vld [vmem:[%s1688 + $0x10] sm:$0xff]
  %v1692 = vld [vmem:[%s1688 + $0x18] sm:$0xff]
  %v1693 = vpack.c.bf16 %v1687, %v1686
  %v1694 = vpack.c.bf16 %v1690, %v1689
  %v1695 = vpack.c.bf16 %v1692, %v1691
  %s1696 = scalar_lea.vmem %s11, 1
  %v1697 = vld [vmem:[%s1696] sm:$0x1]
  %v1699 = vlaneseq
  %v1700 = vshrl.u32 %v1699, 7
  %v1701 = vsub.s32 0, %v1700
  %v1702 = vrot.slane %v1697, %v1701
  %v1705 = vsel %vm302, %v1693, 0
  %1707 = vmatprep.subr.bf16.mxu0 0
  %1708 = vmatpush1.bf16.msra.mxu0 %v1694
  %1709 = vmatprep.subr.bf16.mxu0 0
  %1710 = vmatpush1.bf16.msra.mxu0 %v1695
  %1711 = vmatprep.subr.bf16.mxu0 0
  %1712 = vmatpush1.bf16.msra.mxu0 0
  %1713 = vmatprep.subr.bf16.mxu0 0
  %1714 = vmatpush1.bf16.msra.mxu0 0
  %1715 = vmatprep.subr.bf16.mxu0 0
  %1716 = vmatpush1.bf16.msra.mxu0 0
  %1717 = vmatprep.subr.bf16.mxu0 0
  %1718 = vmatpush1.bf16.msra.mxu0 0
  %1719 = vmatprep.subr.bf16.mxu0 0
  %1720 = vmatpush1.bf16.msra.mxu0 0
  %1721 = vmatprep.subr.bf16.mxu0 0
  %1722 = vmatpush1.bf16.msra.mxu0 0
  %1723 = vmatprep.subr.bf16.mxu0 0
  %1724 = vmatpush1.bf16.msra.mxu0 0
  %1725 = vmatprep.subr.bf16.mxu0 0
  %1726 = vmatpush1.bf16.msra.mxu0 0
  %1727 = vmatprep.subr.bf16.mxu0 0
  %1728 = vmatpush1.bf16.msra.mxu0 0
  %1729 = vmatprep.subr.bf16.mxu0 0
  %1730 = vmatpush1.bf16.msra.mxu0 0
  %1731 = vmatprep.subr.bf16.mxu0 0
  %1732 = vmatpush1.bf16.msra.mxu0 0
  %1733 = vmatprep.subr.bf16.mxu0 0
  %1734 = vmatpush1.bf16.msra.mxu0 0
  %1735 = vmatprep.subr.bf16.mxu0 0
  %1736 = vmatpush1.bf16.msra.mxu0 0
  %1737 = vmatprep.subr.bf16.mxu0 0
  %1738 = vmatpush1.bf16.msra.mxu0 0
  %1739 = vmatprep.mubr.bf16.mxu0 0
  %1740 = vmatmul.mubr.bf16.gmra.mrb[0].mxu0 %v1705
  %v1741 = vpop.f32.mrb[0].mxu0
  %v1742 = vadd.f32 %v1702, %v1741
  %v1743 = vpop.f32.mrb[0].mxu0
  %v1744 = vpop.f32.mrb[0].mxu0
  %v1745 = vadd.f32 %v1702, %v1744
  %v1746 = vpop.f32.mrb[0].mxu0
  %1747 = vdwg.mxu0
  %v1748 = vadd.f32 %v1742, %v1176
  %v1749 = vadd.f32 %v1745, %v1177
  %s1750 = scalar_lea.vmem %s12, 1
  %v1751 = vld [vmem:[%s1750] sm:$0x1]
  %s1752 = scalar_lea.vmem %s13, 1
  %v1753 = vld [vmem:[%s1752] sm:$0x1]
  %v1754 = vsel %vm302, %v1748, 0.0
  %1755 = vadd.xlane.f32.xlu0 %v1754
  %v1756 = vpop.xlane.xlu0 %1755
  %v1757 = vsel %vm302, %v1749, 0.0
  %1758 = vadd.xlane.f32.xlu0 %v1757
  %v1759 = vpop.xlane.xlu0 %1758
  %v1760 = vmul.f32 %v1756, %v309
  %v1761 = vmul.f32 %v1759, %v309
  %v1762 = vmul.f32 %v1748, %v1748
  %v1763 = vmul.f32 %v1749, %v1749
  %v1764 = vsel %vm302, %v1762, 0.0
  %1765 = vadd.xlane.f32.xlu0 %v1764
  %v1766 = vpop.xlane.xlu0 %1765
  %v1767 = vsel %vm302, %v1763, 0.0
  %1768 = vadd.xlane.f32.xlu0 %v1767
  %v1769 = vpop.xlane.xlu0 %1768
  %v1770 = vmul.f32 %v1766, %v309
  %v1771 = vmul.f32 %v1769, %v309
  %v1772 = vmul.f32 %v1760, %v1760
  %v1773 = vmul.f32 %v1761, %v1761
  %v1774 = vsub.f32 %v1770, %v1772
  %v1775 = vsub.f32 %v1771, %v1773
  %v1776 = vsub.f32 %v1748, %v1760
  %v1777 = vsub.f32 %v1749, %v1761
  %v1778 = vadd.f32 %v1774, 1e-12
  %v1779 = vadd.f32 %v1775, 1e-12
  %v1780 = vrsqrt.pop %v1778
  %v1781 = vrsqrt.pop %v1779
  %v1782 = vmul.f32 %v1776, %v1780
  %v1783 = vmul.f32 %v1777, %v1781
  %v1785 = vlaneseq
  %v1786 = vshrl.u32 %v1785, 7
  %v1787 = vsub.s32 0, %v1786
  %v1788 = vrot.slane %v1751, %v1787
  %v1790 = vmul.f32 %v1782, %v1788
  %v1791 = vmul.f32 %v1783, %v1788
  %v1793 = vlaneseq
  %v1794 = vshrl.u32 %v1793, 7
  %v1795 = vsub.s32 0, %v1794
  %v1796 = vrot.slane %v1753, %v1795
  %v1798 = vadd.f32 %v1790, %v1796
  %v1799 = vadd.f32 %v1791, %v1796
  %s1800 = scalar_lea.vmem %s14, 32
  %v1801 = vld [vmem:[%s1800] sm:$0xff]
  %v1802 = vld [vmem:[%s1800 + $0x8] sm:$0xff]
  %v1803 = vld [vmem:[%s1800 + $0x10] sm:$0xff]
  %v1804 = vld [vmem:[%s1800 + $0x18] sm:$0xff]
  %v1805 = vpack.c.bf16 %v1799, %v1798
  %v1806 = vpack.c.bf16 %v1802, %v1801
  %v1807 = vpack.c.bf16 %v1804, %v1803
  %s1808 = scalar_lea.vmem %s15, 1
  %v1809 = vld [vmem:[%s1808] sm:$0x1]
  %v1811 = vlaneseq
  %v1812 = vshrl.u32 %v1811, 7
  %v1813 = vsub.s32 0, %v1812
  %v1814 = vrot.slane %v1809, %v1813
  %v1817 = vsel %vm302, %v1805, 0
  %1819 = vmatprep.subr.bf16.mxu0 0
  %1820 = vmatpush1.bf16.msra.mxu0 %v1806
  %1821 = vmatprep.subr.bf16.mxu0 0
  %1822 = vmatpush1.bf16.msra.mxu0 %v1807
  %1823 = vmatprep.subr.bf16.mxu0 0
  %1824 = vmatpush1.bf16.msra.mxu0 0
  %1825 = vmatprep.subr.bf16.mxu0 0
  %1826 = vmatpush1.bf16.msra.mxu0 0
  %1827 = vmatprep.subr.bf16.mxu0 0
  %1828 = vmatpush1.bf16.msra.mxu0 0
  %1829 = vmatprep.subr.bf16.mxu0 0
  %1830 = vmatpush1.bf16.msra.mxu0 0
  %1831 = vmatprep.subr.bf16.mxu0 0
  %1832 = vmatpush1.bf16.msra.mxu0 0
  %1833 = vmatprep.subr.bf16.mxu0 0
  %1834 = vmatpush1.bf16.msra.mxu0 0
  %1835 = vmatprep.subr.bf16.mxu0 0
  %1836 = vmatpush1.bf16.msra.mxu0 0
  %1837 = vmatprep.subr.bf16.mxu0 0
  %1838 = vmatpush1.bf16.msra.mxu0 0
  %1839 = vmatprep.subr.bf16.mxu0 0
  %1840 = vmatpush1.bf16.msra.mxu0 0
  %1841 = vmatprep.subr.bf16.mxu0 0
  %1842 = vmatpush1.bf16.msra.mxu0 0
  %1843 = vmatprep.subr.bf16.mxu0 0
  %1844 = vmatpush1.bf16.msra.mxu0 0
  %1845 = vmatprep.subr.bf16.mxu0 0
  %1846 = vmatpush1.bf16.msra.mxu0 0
  %1847 = vmatprep.subr.bf16.mxu0 0
  %1848 = vmatpush1.bf16.msra.mxu0 0
  %1849 = vmatprep.subr.bf16.mxu0 0
  %1850 = vmatpush1.bf16.msra.mxu0 0
  %1851 = vmatprep.mubr.bf16.mxu0 0
  %1852 = vmatmul.mubr.bf16.gmra.mrb[0].mxu0 %v1817
  %v1853 = vpop.f32.mrb[0].mxu0
  %v1854 = vadd.f32 %v1814, %v1853
  %v1855 = vpop.f32.mrb[0].mxu0
  %v1856 = vpop.f32.mrb[0].mxu0
  %v1857 = vadd.f32 %v1814, %v1856
  %v1858 = vpop.f32.mrb[0].mxu0
  %1859 = vdwg.mxu0
  %v1860 = vmul.f32 %v1854, %v1854
  %v1861 = vmul.f32 %v1857, %v1857
  %v1862 = vmul.f32 %v1854, %v1860
  %v1863 = vmul.f32 %v1857, %v1861
  %v1864 = vmul.f32 %v1862, 0.044715
  %v1865 = vmul.f32 %v1863, 0.044715
  %v1866 = vadd.f32 %v1854, %v1864
  %v1867 = vadd.f32 %v1857, %v1865
  %v1868 = vmul.f32 %v1866, 0.7978846
  %v1869 = vmul.f32 %v1867, 0.7978846
  %v1870 = vtanh.pop %v1868
  %v1871 = vtanh.pop %v1869
  %v1872 = vadd.f32 %v1870, 1.0
  %v1873 = vadd.f32 %v1871, 1.0
  %v1874 = vmul.f32 %v1872, 0.5
  %v1875 = vmul.f32 %v1873, 0.5
  %v1876 = vmul.f32 %v1854, %v1874
  %v1877 = vmul.f32 %v1857, %v1875
  %s1878 = scalar_lea.vmem %s16, 64
  %v1879 = vld [vmem:[%s1878] sm:$0xff]
  %v1880 = vld [vmem:[%s1878 + $0x8] sm:$0xff]
  %v1881 = vld [vmem:[%s1878 + $0x10] sm:$0xff]
  %v1882 = vld [vmem:[%s1878 + $0x18] sm:$0xff]
  %v1883 = vld [vmem:[%s1878 + $0x20] sm:$0xff]
  %v1884 = vld [vmem:[%s1878 + $0x28] sm:$0xff]
  %v1885 = vld [vmem:[%s1878 + $0x30] sm:$0xff]
  %v1886 = vld [vmem:[%s1878 + $0x38] sm:$0xff]
  %v1887 = vpack.c.bf16 %v1877, %v1876
  %v1888 = vpack.c.bf16 %v1880, %v1879
  %v1889 = vpack.c.bf16 %v1882, %v1881
  %v1890 = vpack.c.bf16 %v1884, %v1883
  %v1891 = vpack.c.bf16 %v1886, %v1885
  %s1892 = scalar_lea.vmem %s17, 1
  %v1893 = vld [vmem:[%s1892] sm:$0x1]
  %v1895 = vlaneseq
  %v1896 = vshrl.u32 %v1895, 7
  %v1897 = vsub.s32 0, %v1896
  %v1898 = vrot.slane %v1893, %v1897
  %v1901 = vsel %vm1083, %v1887, 0
  %1903 = vmatprep.subr.bf16.mxu0 0
  %1904 = vmatpush1.bf16.msra.mxu0 %v1888
  %1905 = vmatprep.subr.bf16.mxu0 0
  %1906 = vmatpush1.bf16.msra.mxu0 %v1889
  %1907 = vmatprep.subr.bf16.mxu0 0
  %1908 = vmatpush1.bf16.msra.mxu0 %v1890
  %1909 = vmatprep.subr.bf16.mxu0 0
  %1910 = vmatpush1.bf16.msra.mxu0 %v1891
  %1911 = vmatprep.subr.bf16.mxu0 0
  %1912 = vmatpush1.bf16.msra.mxu0 0
  %1913 = vmatprep.subr.bf16.mxu0 0
  %1914 = vmatpush1.bf16.msra.mxu0 0
  %1915 = vmatprep.subr.bf16.mxu0 0
  %1916 = vmatpush1.bf16.msra.mxu0 0
  %1917 = vmatprep.subr.bf16.mxu0 0
  %1918 = vmatpush1.bf16.msra.mxu0 0
  %1919 = vmatprep.subr.bf16.mxu0 0
  %1920 = vmatpush1.bf16.msra.mxu0 0
  %1921 = vmatprep.subr.bf16.mxu0 0
  %1922 = vmatpush1.bf16.msra.mxu0 0
  %1923 = vmatprep.subr.bf16.mxu0 0
  %1924 = vmatpush1.bf16.msra.mxu0 0
  %1925 = vmatprep.subr.bf16.mxu0 0
  %1926 = vmatpush1.bf16.msra.mxu0 0
  %1927 = vmatprep.subr.bf16.mxu0 0
  %1928 = vmatpush1.bf16.msra.mxu0 0
  %1929 = vmatprep.subr.bf16.mxu0 0
  %1930 = vmatpush1.bf16.msra.mxu0 0
  %1931 = vmatprep.subr.bf16.mxu0 0
  %1932 = vmatpush1.bf16.msra.mxu0 0
  %1933 = vmatprep.subr.bf16.mxu0 0
  %1934 = vmatpush1.bf16.msra.mxu0 0
  %1935 = vmatprep.mubr.bf16.mxu0 0
  %1936 = vmatmul.mubr.bf16.gmra.mrb[0].mxu0 %v1901
  %v1937 = vpop.f32.mrb[0].mxu0
  %v1938 = vadd.f32 %v1898, %v1937
  %v1939 = vpop.f32.mrb[0].mxu0
  %v1940 = vpop.f32.mrb[0].mxu0
  %v1941 = vadd.f32 %v1898, %v1940
  %v1942 = vpop.f32.mrb[0].mxu0
  %1943 = vdwg.mxu0
  %v1944 = vadd.f32 %v1938, %v1798
  %v1945 = vadd.f32 %v1941, %v1799
  %s1946 = scalar_lea.vmem %s18, 1
  %v1947 = vld [vmem:[%s1946] sm:$0x1]
  %s1948 = scalar_lea.vmem %s19, 1
  %v1949 = vld [vmem:[%s1948] sm:$0x1]
  %v1950 = vsel %vm302, %v1944, 0.0
  %1951 = vadd.xlane.f32.xlu0 %v1950
  %v1952 = vpop.xlane.xlu0 %1951
  %v1953 = vsel %vm302, %v1945, 0.0
  %1954 = vadd.xlane.f32.xlu0 %v1953
  %v1955 = vpop.xlane.xlu0 %1954
  %v1956 = vmul.f32 %v1952, %v309
  %v1957 = vmul.f32 %v1955, %v309
  %v1958 = vmul.f32 %v1944, %v1944
  %v1959 = vmul.f32 %v1945, %v1945
  %v1960 = vsel %vm302, %v1958, 0.0
  %1961 = vadd.xlane.f32.xlu0 %v1960
  %v1962 = vpop.xlane.xlu0 %1961
  %v1963 = vsel %vm302, %v1959, 0.0
  %1964 = vadd.xlane.f32.xlu0 %v1963
  %v1965 = vpop.xlane.xlu0 %1964
  %v1966 = vmul.f32 %v1962, %v309
  %v1967 = vmul.f32 %v1965, %v309
  %v1968 = vmul.f32 %v1956, %v1956
  %v1969 = vmul.f32 %v1957, %v1957
  %v1970 = vsub.f32 %v1966, %v1968
  %v1971 = vsub.f32 %v1967, %v1969
  %v1972 = vsub.f32 %v1944, %v1956
  %v1973 = vsub.f32 %v1945, %v1957
  %v1974 = vadd.f32 %v1970, 1e-12
  %v1975 = vadd.f32 %v1971, 1e-12
  %v1976 = vrsqrt.pop %v1974
  %v1977 = vrsqrt.pop %v1975
  %v1978 = vmul.f32 %v1972, %v1976
  %v1979 = vmul.f32 %v1973, %v1977
  %v1981 = vlaneseq
  %v1982 = vshrl.u32 %v1981, 7
  %v1983 = vsub.s32 0, %v1982
  %v1984 = vrot.slane %v1947, %v1983
  %v1986 = vmul.f32 %v1978, %v1984
  %v1987 = vmul.f32 %v1979, %v1984
  %v1989 = vlaneseq
  %v1990 = vshrl.u32 %v1989, 7
  %v1991 = vsub.s32 0, %v1990
  %v1992 = vrot.slane %v1949, %v1991
  %v1994 = vadd.f32 %v1986, %v1992
  %v1995 = vadd.f32 %v1987, %v1992
  %v1996 = vld [vmem:[%s20] sm:$0xff]
  %v1997 = vld [vmem:[%s20 + $0x8] sm:$0xff]
  %v1998 = vld [vmem:[%s20 + $0x10] sm:$0xff]
  %v1999 = vld [vmem:[%s20 + $0x18] sm:$0xff]
  %v2000 = vpack.c.bf16 %v1994, %v1994
  %v2001 = vpack.c.bf16 %v1995, %v1995
  %v2002 = vpack.c.bf16 %v1997, %v1996
  %v2003 = vpack.c.bf16 %v1999, %v1998
  %v2004 = vld [vmem:[%s21] sm:$0x1]
  %v2006 = vlaneseq
  %v2007 = vshrl.u32 %v2006, 7
  %v2008 = vsub.s32 0, %v2007
  %v2009 = vrot.slane %v2004, %v2008
  %v2013 = vunpack.c.l.b16 %v2000
  %v2014 = vunpack.c.l.b16 %v2001
  %v2015 = vrot.slane %v2014, 7
  %vm2016 = vcmask 1041409
  %v2017 = vsel %vm2016, %v2015, %v2013
  %v2018 = vpack.c.b16 %v2017, %v2017
  %v2020 = vsel %vm302, %v2018, 0
  %2022 = vmatprep.subr.bf16.mxu0 0
  %2023 = vmatpush1.bf16.msra.mxu0 %v2002
  %2024 = vmatprep.subr.bf16.mxu0 0
  %2025 = vmatpush1.bf16.msra.mxu0 %v2003
  %2026 = vmatprep.subr.bf16.mxu0 0
  %2027 = vmatpush1.bf16.msra.mxu0 0
  %2028 = vmatprep.subr.bf16.mxu0 0
  %2029 = vmatpush1.bf16.msra.mxu0 0
  %2030 = vmatprep.subr.bf16.mxu0 0
  %2031 = vmatpush1.bf16.msra.mxu0 0
  %2032 = vmatprep.subr.bf16.mxu0 0
  %2033 = vmatpush1.bf16.msra.mxu0 0
  %2034 = vmatprep.subr.bf16.mxu0 0
  %2035 = vmatpush1.bf16.msra.mxu0 0
  %2036 = vmatprep.subr.bf16.mxu0 0
  %2037 = vmatpush1.bf16.msra.mxu0 0
  %2038 = vmatprep.subr.bf16.mxu0 0
  %2039 = vmatpush1.bf16.msra.mxu0 0
  %2040 = vmatprep.subr.bf16.mxu0 0
  %2041 = vmatpush1.bf16.msra.mxu0 0
  %2042 = vmatprep.subr.bf16.mxu0 0
  %2043 = vmatpush1.bf16.msra.mxu0 0
  %2044 = vmatprep.subr.bf16.mxu0 0
  %2045 = vmatpush1.bf16.msra.mxu0 0
  %2046 = vmatprep.subr.bf16.mxu0 0
  %2047 = vmatpush1.bf16.msra.mxu0 0
  %2048 = vmatprep.subr.bf16.mxu0 0
  %2049 = vmatpush1.bf16.msra.mxu0 0
  %2050 = vmatprep.subr.bf16.mxu0 0
  %2051 = vmatpush1.bf16.msra.mxu0 0
  %2052 = vmatprep.subr.bf16.mxu0 0
  %2053 = vmatpush1.bf16.msra.mxu0 0
  %2054 = vmatprep.mubr.bf16.mxu0 0
  %2055 = vmatmul.mubr.bf16.gmra.mrb[0].mxu0 %v2020
  %v2056 = vpop.f32.mrb[0].mxu0
  %v2057 = vadd.f32 %v2009, %v2056
  %v2058 = vpop.f32.mrb[0].mxu0
  %v2059 = vpop.f32.mrb[0].mxu0
  %v2060 = vpop.f32.mrb[0].mxu0
  %2061 = vdwg.mxu0
  %v2062 = vtanh.pop %v2057
  %v2063 = vld [vmem:[%s22] sm:$0xff]
  %v2064 = vld [vmem:[%s22 + $0x8] sm:$0xff]
  %v2065 = vld [vmem:[%s22 + $0x10] sm:$0xff]
  %v2066 = vld [vmem:[%s22 + $0x18] sm:$0xff]
  %v2067 = vpack.c.bf16 %v2062, %v2062
  %v2068 = vpack.c.bf16 %v2064, %v2063
  %v2069 = vpack.c.bf16 %v2066, %v2065
  %v2070 = vld [vmem:[#allocation2] sm:$0x1]
  %v2072 = vlaneseq
  %v2073 = vshrl.u32 %v2072, 7
  %v2074 = vsub.s32 0, %v2073
  %v2075 = vrot.slane %v2070, %v2074
  %v2078 = vsel %vm302, %v2067, 0
  %2080 = vmatprep.subr.bf16.mxu0 0
  %2081 = vmatpush1.bf16.msra.mxu0 %v2068
  %2082 = vmatprep.subr.bf16.mxu0 0
  %2083 = vmatpush1.bf16.msra.mxu0 %v2069
  %2084 = vmatprep.subr.bf16.mxu0 0
  %2085 = vmatpush1.bf16.msra.mxu0 0
  %2086 = vmatprep.subr.bf16.mxu0 0
  %2087 = vmatpush1.bf16.msra.mxu0 0
  %2088 = vmatprep.subr.bf16.mxu0 0
  %2089 = vmatpush1.bf16.msra.mxu0 0
  %2090 = vmatprep.subr.bf16.mxu0 0
  %2091 = vmatpush1.bf16.msra.mxu0 0
  %2092 = vmatprep.subr.bf16.mxu0 0
  %2093 = vmatpush1.bf16.msra.mxu0 0
  %2094 = vmatprep.subr.bf16.mxu0 0
  %2095 = vmatpush1.bf16.msra.mxu0 0
  %2096 = vmatprep.subr.bf16.mxu0 0
  %2097 = vmatpush1.bf16.msra.mxu0 0
  %2098 = vmatprep.subr.bf16.mxu0 0
  %2099 = vmatpush1.bf16.msra.mxu0 0
  %2100 = vmatprep.subr.bf16.mxu0 0
  %2101 = vmatpush1.bf16.msra.mxu0 0
  %2102 = vmatprep.subr.bf16.mxu0 0
  %2103 = vmatpush1.bf16.msra.mxu0 0
  %2104 = vmatprep.subr.bf16.mxu0 0
  %2105 = vmatpush1.bf16.msra.mxu0 0
  %2106 = vmatprep.subr.bf16.mxu0 0
  %2107 = vmatpush1.bf16.msra.mxu0 0
  %2108 = vmatprep.subr.bf16.mxu0 0
  %2109 = vmatpush1.bf16.msra.mxu0 0
  %2110 = vmatprep.subr.bf16.mxu0 0
  %2111 = vmatpush1.bf16.msra.mxu0 0
  %2112 = vmatprep.mubr.bf16.mxu0 0
  %2113 = vmatmul.mubr.bf16.gmra.mrb[0].mxu0 %v2078
  %v2114 = vpop.f32.mrb[0].mxu0
  %v2115 = vadd.f32 %v2075, %v2114
  %v2116 = vpop.f32.mrb[0].mxu0
  %v2117 = vpop.f32.mrb[0].mxu0
  %v2118 = vpop.f32.mrb[0].mxu0
  %2119 = vdwg.mxu0
  %v2120 = vxor.u32 %v2115, 2147483648
  %v2121 = vmul.f32 %v2120, 1.442695
  %v2122 = vpow.pop %v2121
  %v2123 = vadd.f32 %v2122, 1.0
  %v2124 = vrcp.pop %v2123
  %v2125 = vmul.f32 1.0, %v2124
  %vm2126 = vcmask 1024
  %2127 = vst.msk [vmem:[%s24] sm:$0x3] %vm2126, %v2125
  // Predicated region
  $region98: #{vanilla_bert_forward.1} parent=0 // pred_check
    _
  $region99: #{vanilla_bert_forward.1} parent=0 // pred_check_branch
    %2129 = sbr.rel (0) target = $region101
  $region100: #{vanilla_bert_forward.1} parent=0 // pred_region
    _
  $region101: #{vanilla_bert_forward.1} parent=0 // pred_fallthru
    _
  // Predicated region
  $region102: #{vanilla_bert_forward.1} parent=0 // pred_check
    _
  $region103: #{vanilla_bert_forward.1} parent=0 // pred_check_branch
    %2131 = sbr.rel (0) target = $region105
  $region104: #{vanilla_bert_forward.1} parent=0 // pred_region
    _
  $region105: #{vanilla_bert_forward.1} parent=0 // pred_fallthru
    _

</llo_original>
